<compile_context>
chip_gen: v6e
topology: v6e:2x2x1
jax: 0.10.0
libtpu: 0.0.40
codegen_flags: <defaults>
</compile_context>

<pallas_src>
import functools

import jax
import jax.numpy as jnp
from jax.experimental import pallas as pl
from jax.experimental.pallas import tpu as pltpu


def _attention_kernel(x_ref, w_qkv_ref, w_p_ref, *refs, H, D, TQ, write_attn):
    # x_ref:     (1, N, C)  bf16   full sequence for this batch element
    # w_qkv_ref: (C, 3C)    bf16   fused [Wq*scale | Wk | Wv], (in, out) layout
    # w_p_ref:   (C, C)     bf16   output projection, (in, out) layout
    # outputs:   out (1, TQ, C), optionally attn (1, H, TQ, N)
    # scratch:   q_scr (H,N,D), k_scr (H,D,N), v_scr (H,N,D), o_scr (TQ,C) bf16
    if write_attn:
        out_ref, attn_ref, q_scr, k_scr, v_scr, o_scr = refs
    else:
        attn_ref = None
        out_ref, q_scr, k_scr, v_scr, o_scr = refs

    C = H * D
    qi = pl.program_id(1)

    # --- once per batch element: fused QKV projection, cached head-major.
    # NOTE: relies on grid order (b outer, qi inner) and qi being "arbitrary";
    # scratch written at qi == 0 is reused by every query tile of this batch.
    @pl.when(qi == 0)
    def _():
        xf = x_ref[0]                                               # (N, C)
        qkv = jnp.dot(xf, w_qkv_ref[...],
                      preferred_element_type=jnp.float32)           # (N, 3C)
        qkv = qkv.astype(jnp.bfloat16)
        for h in range(H):                                          # unrolled
            q_scr[h] = qkv[:, h * D:(h + 1) * D]                    # (N, D)
            k_scr[h] = qkv[:, C + h * D:C + (h + 1) * D].T          # (D, N)
            v_scr[h] = qkv[:, 2 * C + h * D:2 * C + (h + 1) * D]    # (N, D)

    # --- per query tile: slice Q from the resident cache (no extra x DMA).
    q_start = pl.multiple_of(qi * TQ, TQ)
    q3 = q_scr[:, pl.ds(q_start, TQ), :]                            # (H, TQ, D)

    # Head-batched scores on the MXU; K is (H, D, N) -> layout-natural
    # contraction and lane-dense (N) RHS.
    s = jnp.einsum('hqd,hdn->hqn', q3, k_scr[...],
                   preferred_element_type=jnp.float32)              # (H, TQ, N)

    # Numerically stable softmax; divide via EUP approx reciprocal.
    s = s - jnp.max(s, axis=-1, keepdims=True)
    p = jnp.exp(s)
    p = p * pl.reciprocal(jnp.sum(p, axis=-1, keepdims=True), approx=True)

    if write_attn:
        attn_ref[0] = p.astype(attn_ref.dtype)                      # bf16 store

    # Head-batched attention @ V.
    o = jnp.einsum('hqn,hnd->hqd', p.astype(jnp.bfloat16), v_scr[...],
                   preferred_element_type=jnp.float32)              # (H, TQ, D)

    # Rearrange 'h q d -> q (h d)' with per-head lane-slice stores (no 3-D
    # transpose), then one fused output projection on the MXU.
    for h in range(H):
        o_scr[:, h * D:(h + 1) * D] = o[h].astype(jnp.bfloat16)
    out_ref[0] = jnp.dot(o_scr[...], w_p_ref[...],
                         preferred_element_type=jnp.float32).astype(out_ref.dtype)


def prepare_attention_weights(w_qkv, w_proj, num_heads):
    """One-time host-side transform of PyTorch-layout weights.

    w_qkv:  (3C, C)  nn.Linear(dim, 3*dim, bias=False).weight
    w_proj: (C, C)   nn.Linear(dim, dim, bias=False).weight
    Returns bf16 (in, out)-layout fused W_qkv (scale folded into Q) and W_proj.
    """
    three_c, C = w_qkv.shape
    assert three_c == 3 * C
    D = C // num_heads
    scale = float(D) ** -0.5
    w_qkv = jnp.asarray(w_qkv, jnp.float32)
    w_fused = jnp.concatenate([w_qkv[:C] * scale, w_qkv[C:]], axis=0)   # (3C, C)
    w_qkv_t = w_fused.T.astype(jnp.bfloat16)                            # (C, 3C)
    w_p_t = jnp.asarray(w_proj, jnp.float32).T.astype(jnp.bfloat16)     # (C, C)
    return w_qkv_t, w_p_t


def _pick_q_tile(N, max_tile=128):
    """Largest query tile <= max_tile dividing N with TQ % 16 == 0 (bf16 tiling)."""
    if N <= max_tile:
        return N
    for t in range(max_tile, 15, -1):
        if N % t == 0 and t % 16 == 0:
            return t
    return N   # fallback (awkward N); see TODO about host-side padding


def attention_forward(x, w_qkv_t, w_proj_t, num_heads, *, q_tile=128,
                      attn_dtype=jnp.bfloat16, return_attn=True,
                      vmem_limit_bytes=64 * 1024 * 1024):
    """x: (B, N, C); weights from prepare_attention_weights.

    Returns (out, attn) with attn in `attn_dtype` (bf16 default to halve the
    dominant HBM writeback), or (out, None) if return_attn=False.
    """
    B, N, C = x.shape
    H = num_heads
    assert C % H == 0
    D = C // H
    TQ = _pick_q_tile(N, q_tile)
    assert N % TQ == 0

    x_bf = x.astype(jnp.bfloat16)   # halve input DMA traffic; f32 accum inside.
    kernel = functools.partial(_attention_kernel, H=H, D=D, TQ=TQ,
                               write_attn=return_attn)

    in_specs = [
        # Full sequence, one block per batch element (double-buffered so the
        # next batch's sequence prefetch overlaps the qi loop).
        pl.BlockSpec((1, N, C), lambda b, qi: (b, 0, 0)),
        # Constant weights: whole-array VMEM residents -> fetched once, no
        # per-step DMA and no double buffering.
        pl.BlockSpec(memory_space=pltpu.MemorySpace.VMEM),
        pl.BlockSpec(memory_space=pltpu.MemorySpace.VMEM),
    ]
    out_spec = pl.BlockSpec((1, TQ, C), lambda b, qi: (b, qi, 0))
    out_shp = jax.ShapeDtypeStruct((B, N, C), x.dtype)
    if return_attn:
        out_specs = [out_spec,
                     pl.BlockSpec((1, H, TQ, N), lambda b, qi: (b, 0, qi, 0))]
        out_shape = [out_shp,
                     jax.ShapeDtypeStruct((B, H, N, N), attn_dtype)]
    else:
        out_specs = out_spec
        out_shape = out_shp

    results = pl.pallas_call(
        kernel,
        grid=(B, N // TQ),
        in_specs=in_specs,
        out_specs=out_specs,
        out_shape=out_shape,
        scratch_shapes=[
            pltpu.VMEM((H, N, D), jnp.bfloat16),   # Q cache (head-major)
            pltpu.VMEM((H, D, N), jnp.bfloat16),   # K cache (lane dim = N)
            pltpu.VMEM((H, N, D), jnp.bfloat16),   # V cache (head-major)
            pltpu.VMEM((TQ, C), jnp.bfloat16),     # per-tile o reassembly
        ],
        compiler_params=pltpu.CompilerParams(
            dimension_semantics=("parallel", "arbitrary"),
            vmem_limit_bytes=vmem_limit_bytes),
    )(x_bf, w_qkv_t, w_proj_t)

    if return_attn:
        out, attn = results
        return out, attn
    return results, None


def _reference_forward(x, w_qkv, w_proj, num_heads):
    # Pure-JAX f32 reference mirroring the PyTorch forward (dropout = identity).
    B, N, C = x.shape
    H = num_heads
    D = C // H
    scale = float(D) ** -0.5
    qkv = jnp.einsum('bnc,oc->bno', x, w_qkv)                # (B, N, 3C)
    q, k, v = jnp.split(qkv, 3, axis=-1)

    def to_heads(t):
        return t.reshape(B, N, H, D).transpose(0, 2, 1, 3)   # (B, H, N, D)

    q, k, v = map(to_heads, (q, k, v))
    q = q * scale
    attn = jnp.einsum('bhid,bhjd->bhij', q, k)
    attn = jax.nn.softmax(attn, axis=-1)
    o = jnp.einsum('bhij,bhjd->bhid', attn, v)
    o = o.transpose(0, 2, 1, 3).reshape(B, N, C)
    out = jnp.einsum('bnc,oc->bno', o, w_proj)
    return out, attn


if __name__ == "__main__":
    B, N, C = 2, 32, 64
    num_heads = 8

    key = jax.random.PRNGKey(0)
    kx, kqkv, kproj = jax.random.split(key, 3)

    x = jax.random.normal(kx, (B, N, C), dtype=jnp.float32)
    # PyTorch nn.Linear weight layout: (out_features, in_features), no bias.
    w_qkv = jax.random.normal(kqkv, (3 * C, C), dtype=jnp.float32) * (C ** -0.5)
    w_proj = jax.random.normal(kproj, (C, C), dtype=jnp.float32) * (C ** -0.5)

    # One-time weight prep (fuse + transpose + scale fold + bf16 cast).
    w_qkv_t, w_p_t = prepare_attention_weights(w_qkv, w_proj, num_heads)

    # q_tile=16 -> 2 query tiles per batch element; exercises the per-batch
    # Q/K/V cache reuse across grid steps.
    out, attn = attention_forward(x, w_qkv_t, w_p_t, num_heads, q_tile=16)
    out = jax.block_until_ready(out)
    attn = jax.block_until_ready(attn)

    ref_out, ref_attn = _reference_forward(x, w_qkv, w_proj, num_heads)
    assert out.shape == (B, N, C) and attn.shape == (B, num_heads, N, N)
    # bf16 matmul operands / bf16 attn writeback -> looser tolerances vs f32.
    assert jnp.allclose(out, ref_out, atol=1e-1, rtol=1e-1), (
        float(jnp.max(jnp.abs(out - ref_out))))
    assert jnp.allclose(attn.astype(jnp.float32), ref_attn,
                        atol=5e-2, rtol=5e-2), (
        float(jnp.max(jnp.abs(attn.astype(jnp.float32) - ref_attn))))

    # Flash-style path: skip the (B, H, N, N) probability writeback entirely.
    out2, _ = attention_forward(x, w_qkv_t, w_p_t, num_heads, q_tile=16,
                                return_attn=False)
    out2 = jax.block_until_ready(out2)
    assert jnp.allclose(out2, ref_out, atol=1e-1, rtol=1e-1)

    print("KERNEL_OK")
</pallas_src>

<mosaic_0001>
module attributes {stable_mosaic.version = 11 : i64} {
  func.func @_attention_kernel(%arg0: i32, %arg1: i32, %arg2: memref<1x32x64xbf16, #tpu.memory_space<vmem>>, %arg3: memref<64x192xbf16, #tpu.memory_space<vmem>>, %arg4: memref<64x64xbf16, #tpu.memory_space<vmem>>, %arg5: memref<1x16x64xf32, #tpu.memory_space<vmem>>, %arg6: memref<1x8x16x32xbf16, #tpu.memory_space<vmem>>, %arg7: memref<8x32x8xbf16, #tpu.memory_space<vmem>>, %arg8: memref<8x8x32xbf16, #tpu.memory_space<vmem>>, %arg9: memref<8x32x8xbf16, #tpu.memory_space<vmem>>, %arg10: memref<16x64xbf16, #tpu.memory_space<vmem>>) attributes {dimension_semantics = [#tpu.dimension_semantics<parallel>, #tpu.dimension_semantics<arbitrary>], iteration_bounds = array<i64: 2, 2>, scalar_prefetch = 0 : i64, scratch_operands = 4 : i64, tpu.core_type = #tpu.core_type<tc>, window_params = [{transform_indices = @transform_0, window_bounds = array<i64: 1, 32, 64>}, {pipeline_mode = #tpu.pipeline_mode<synchronous>, transform_indices = @transform_1, window_bounds = array<i64: 64, 192>}, {pipeline_mode = #tpu.pipeline_mode<synchronous>, transform_indices = @transform_2, window_bounds = array<i64: 64, 64>}, {transform_indices = @transform_3, window_bounds = array<i64: 1, 16, 64>}, {transform_indices = @transform_4, window_bounds = array<i64: 1, 8, 16, 32>}]} {
    %c0_i32 = arith.constant 0 : i32
    %0 = arith.cmpi eq, %arg1, %c0_i32 : i32
    %1 = arith.extui %0 : i1 to i32
    %c0_i32_0 = arith.constant 0 : i32
    %2 = arith.cmpi ne, %1, %c0_i32_0 : i32
    scf.if %2 {
      %c0_32 = arith.constant 0 : index
      %c0_33 = arith.constant 0 : index
      %c0_34 = arith.constant 0 : index
      %64 = vector.load %arg2[%c0_32, %c0_33, %c0_34] : memref<1x32x64xbf16, #tpu.memory_space<vmem>>, vector<1x32x64xbf16>
      %65 = vector.shape_cast %64 : vector<1x32x64xbf16> to vector<32x64xbf16>
      %c0_35 = arith.constant 0 : index
      %c0_36 = arith.constant 0 : index
      %66 = vector.load %arg3[%c0_35, %c0_36] : memref<64x192xbf16, #tpu.memory_space<vmem>>, vector<64x192xbf16>
      %cst_37 = arith.constant dense<0.000000e+00> : vector<32x192xf32>
      %67 = tpu.matmul %65, %66, %cst_37 {dimension_numbers = #tpu.dot_dimension_numbers<[1], [0], [0], [1], [0, 0, 1, 1], [], []>} : vector<32x64xbf16>, vector<64x192xbf16>, vector<32x192xf32> -> vector<32x192xf32>
      %68 = arith.truncf %67 : vector<32x192xf32> to vector<32x192xbf16>
      %69 = vector.extract_strided_slice %68 {offsets = [0, 0], sizes = [32, 8], strides = [1, 1]} : vector<32x192xbf16> to vector<32x8xbf16>
      %c0_38 = arith.constant 0 : index
      %c0_39 = arith.constant 0 : index
      %c0_40 = arith.constant 0 : index
      %70 = vector.load %arg7[%c0_38, %c0_39, %c0_40] : memref<8x32x8xbf16, #tpu.memory_space<vmem>>, vector<1x32x8xbf16>
      %71 = vector.shape_cast %70 : vector<1x32x8xbf16> to vector<32x8xbf16>
      %72 = vector.shape_cast %69 : vector<32x8xbf16> to vector<1x32x8xbf16>
      tpu.vector_store %arg7[%c0_38, %c0_39, %c0_40], %72 {strides = array<i32>} : memref<8x32x8xbf16, #tpu.memory_space<vmem>>, vector<1x32x8xbf16>,
      %73 = vector.extract_strided_slice %68 {offsets = [0, 64], sizes = [32, 8], strides = [1, 1]} : vector<32x192xbf16> to vector<32x8xbf16>
      %74 = tpu.transpose %73, [1, 0] : vector<32x8xbf16> -> vector<8x32xbf16>
      %c0_41 = arith.constant 0 : index
      %c0_42 = arith.constant 0 : index
      %c0_43 = arith.constant 0 : index
      %75 = vector.load %arg8[%c0_41, %c0_42, %c0_43] : memref<8x8x32xbf16, #tpu.memory_space<vmem>>, vector<1x8x32xbf16>
      %76 = vector.shape_cast %75 : vector<1x8x32xbf16> to vector<8x32xbf16>
      %77 = vector.shape_cast %74 : vector<8x32xbf16> to vector<1x8x32xbf16>
      tpu.vector_store %arg8[%c0_41, %c0_42, %c0_43], %77 {strides = array<i32>} : memref<8x8x32xbf16, #tpu.memory_space<vmem>>, vector<1x8x32xbf16>,
      %78 = vector.extract_strided_slice %68 {offsets = [0, 128], sizes = [32, 8], strides = [1, 1]} : vector<32x192xbf16> to vector<32x8xbf16>
      %c0_44 = arith.constant 0 : index
      %c0_45 = arith.constant 0 : index
      %c0_46 = arith.constant 0 : index
      %79 = vector.load %arg9[%c0_44, %c0_45, %c0_46] : memref<8x32x8xbf16, #tpu.memory_space<vmem>>, vector<1x32x8xbf16>
      %80 = vector.shape_cast %79 : vector<1x32x8xbf16> to vector<32x8xbf16>
      %81 = vector.shape_cast %78 : vector<32x8xbf16> to vector<1x32x8xbf16>
      tpu.vector_store %arg9[%c0_44, %c0_45, %c0_46], %81 {strides = array<i32>} : memref<8x32x8xbf16, #tpu.memory_space<vmem>>, vector<1x32x8xbf16>,
      %82 = vector.extract_strided_slice %68 {offsets = [0, 8], sizes = [32, 8], strides = [1, 1]} : vector<32x192xbf16> to vector<32x8xbf16>
      %c1 = arith.constant 1 : index
      %c0_47 = arith.constant 0 : index
      %c0_48 = arith.constant 0 : index
      %83 = vector.load %arg7[%c1, %c0_47, %c0_48] : memref<8x32x8xbf16, #tpu.memory_space<vmem>>, vector<1x32x8xbf16>
      %84 = vector.shape_cast %83 : vector<1x32x8xbf16> to vector<32x8xbf16>
      %85 = vector.shape_cast %82 : vector<32x8xbf16> to vector<1x32x8xbf16>
      tpu.vector_store %arg7[%c1, %c0_47, %c0_48], %85 {strides = array<i32>} : memref<8x32x8xbf16, #tpu.memory_space<vmem>>, vector<1x32x8xbf16>,
      %86 = vector.extract_strided_slice %68 {offsets = [0, 72], sizes = [32, 8], strides = [1, 1]} : vector<32x192xbf16> to vector<32x8xbf16>
      %87 = tpu.transpose %86, [1, 0] : vector<32x8xbf16> -> vector<8x32xbf16>
      %c1_49 = arith.constant 1 : index
      %c0_50 = arith.constant 0 : index
      %c0_51 = arith.constant 0 : index
      %88 = vector.load %arg8[%c1_49, %c0_50, %c0_51] : memref<8x8x32xbf16, #tpu.memory_space<vmem>>, vector<1x8x32xbf16>
      %89 = vector.shape_cast %88 : vector<1x8x32xbf16> to vector<8x32xbf16>
      %90 = vector.shape_cast %87 : vector<8x32xbf16> to vector<1x8x32xbf16>
      tpu.vector_store %arg8[%c1_49, %c0_50, %c0_51], %90 {strides = array<i32>} : memref<8x8x32xbf16, #tpu.memory_space<vmem>>, vector<1x8x32xbf16>,
      %91 = vector.extract_strided_slice %68 {offsets = [0, 136], sizes = [32, 8], strides = [1, 1]} : vector<32x192xbf16> to vector<32x8xbf16>
      %c1_52 = arith.constant 1 : index
      %c0_53 = arith.constant 0 : index
      %c0_54 = arith.constant 0 : index
      %92 = vector.load %arg9[%c1_52, %c0_53, %c0_54] : memref<8x32x8xbf16, #tpu.memory_space<vmem>>, vector<1x32x8xbf16>
      %93 = vector.shape_cast %92 : vector<1x32x8xbf16> to vector<32x8xbf16>
      %94 = vector.shape_cast %91 : vector<32x8xbf16> to vector<1x32x8xbf16>
      tpu.vector_store %arg9[%c1_52, %c0_53, %c0_54], %94 {strides = array<i32>} : memref<8x32x8xbf16, #tpu.memory_space<vmem>>, vector<1x32x8xbf16>,
      %95 = vector.extract_strided_slice %68 {offsets = [0, 16], sizes = [32, 8], strides = [1, 1]} : vector<32x192xbf16> to vector<32x8xbf16>
      %c2 = arith.constant 2 : index
      %c0_55 = arith.constant 0 : index
      %c0_56 = arith.constant 0 : index
      %96 = vector.load %arg7[%c2, %c0_55, %c0_56] : memref<8x32x8xbf16, #tpu.memory_space<vmem>>, vector<1x32x8xbf16>
      %97 = vector.shape_cast %96 : vector<1x32x8xbf16> to vector<32x8xbf16>
      %98 = vector.shape_cast %95 : vector<32x8xbf16> to vector<1x32x8xbf16>
      tpu.vector_store %arg7[%c2, %c0_55, %c0_56], %98 {strides = array<i32>} : memref<8x32x8xbf16, #tpu.memory_space<vmem>>, vector<1x32x8xbf16>,
      %99 = vector.extract_strided_slice %68 {offsets = [0, 80], sizes = [32, 8], strides = [1, 1]} : vector<32x192xbf16> to vector<32x8xbf16>
      %100 = tpu.transpose %99, [1, 0] : vector<32x8xbf16> -> vector<8x32xbf16>
      %c2_57 = arith.constant 2 : index
      %c0_58 = arith.constant 0 : index
      %c0_59 = arith.constant 0 : index
      %101 = vector.load %arg8[%c2_57, %c0_58, %c0_59] : memref<8x8x32xbf16, #tpu.memory_space<vmem>>, vector<1x8x32xbf16>
      %102 = vector.shape_cast %101 : vector<1x8x32xbf16> to vector<8x32xbf16>
      %103 = vector.shape_cast %100 : vector<8x32xbf16> to vector<1x8x32xbf16>
      tpu.vector_store %arg8[%c2_57, %c0_58, %c0_59], %103 {strides = array<i32>} : memref<8x8x32xbf16, #tpu.memory_space<vmem>>, vector<1x8x32xbf16>,
      %104 = vector.extract_strided_slice %68 {offsets = [0, 144], sizes = [32, 8], strides = [1, 1]} : vector<32x192xbf16> to vector<32x8xbf16>
      %c2_60 = arith.constant 2 : index
      %c0_61 = arith.constant 0 : index
      %c0_62 = arith.constant 0 : index
      %105 = vector.load %arg9[%c2_60, %c0_61, %c0_62] : memref<8x32x8xbf16, #tpu.memory_space<vmem>>, vector<1x32x8xbf16>
      %106 = vector.shape_cast %105 : vector<1x32x8xbf16> to vector<32x8xbf16>
      %107 = vector.shape_cast %104 : vector<32x8xbf16> to vector<1x32x8xbf16>
      tpu.vector_store %arg9[%c2_60, %c0_61, %c0_62], %107 {strides = array<i32>} : memref<8x32x8xbf16, #tpu.memory_space<vmem>>, vector<1x32x8xbf16>,
      %108 = vector.extract_strided_slice %68 {offsets = [0, 24], sizes = [32, 8], strides = [1, 1]} : vector<32x192xbf16> to vector<32x8xbf16>
      %c3 = arith.constant 3 : index
      %c0_63 = arith.constant 0 : index
      %c0_64 = arith.constant 0 : index
      %109 = vector.load %arg7[%c3, %c0_63, %c0_64] : memref<8x32x8xbf16, #tpu.memory_space<vmem>>, vector<1x32x8xbf16>
      %110 = vector.shape_cast %109 : vector<1x32x8xbf16> to vector<32x8xbf16>
      %111 = vector.shape_cast %108 : vector<32x8xbf16> to vector<1x32x8xbf16>
      tpu.vector_store %arg7[%c3, %c0_63, %c0_64], %111 {strides = array<i32>} : memref<8x32x8xbf16, #tpu.memory_space<vmem>>, vector<1x32x8xbf16>,
      %112 = vector.extract_strided_slice %68 {offsets = [0, 88], sizes = [32, 8], strides = [1, 1]} : vector<32x192xbf16> to vector<32x8xbf16>
      %113 = tpu.transpose %112, [1, 0] : vector<32x8xbf16> -> vector<8x32xbf16>
      %c3_65 = arith.constant 3 : index
      %c0_66 = arith.constant 0 : index
      %c0_67 = arith.constant 0 : index
      %114 = vector.load %arg8[%c3_65, %c0_66, %c0_67] : memref<8x8x32xbf16, #tpu.memory_space<vmem>>, vector<1x8x32xbf16>
      %115 = vector.shape_cast %114 : vector<1x8x32xbf16> to vector<8x32xbf16>
      %116 = vector.shape_cast %113 : vector<8x32xbf16> to vector<1x8x32xbf16>
      tpu.vector_store %arg8[%c3_65, %c0_66, %c0_67], %116 {strides = array<i32>} : memref<8x8x32xbf16, #tpu.memory_space<vmem>>, vector<1x8x32xbf16>,
      %117 = vector.extract_strided_slice %68 {offsets = [0, 152], sizes = [32, 8], strides = [1, 1]} : vector<32x192xbf16> to vector<32x8xbf16>
      %c3_68 = arith.constant 3 : index
      %c0_69 = arith.constant 0 : index
      %c0_70 = arith.constant 0 : index
      %118 = vector.load %arg9[%c3_68, %c0_69, %c0_70] : memref<8x32x8xbf16, #tpu.memory_space<vmem>>, vector<1x32x8xbf16>
      %119 = vector.shape_cast %118 : vector<1x32x8xbf16> to vector<32x8xbf16>
      %120 = vector.shape_cast %117 : vector<32x8xbf16> to vector<1x32x8xbf16>
      tpu.vector_store %arg9[%c3_68, %c0_69, %c0_70], %120 {strides = array<i32>} : memref<8x32x8xbf16, #tpu.memory_space<vmem>>, vector<1x32x8xbf16>,
      %121 = vector.extract_strided_slice %68 {offsets = [0, 32], sizes = [32, 8], strides = [1, 1]} : vector<32x192xbf16> to vector<32x8xbf16>
      %c4 = arith.constant 4 : index
      %c0_71 = arith.constant 0 : index
      %c0_72 = arith.constant 0 : index
      %122 = vector.load %arg7[%c4, %c0_71, %c0_72] : memref<8x32x8xbf16, #tpu.memory_space<vmem>>, vector<1x32x8xbf16>
      %123 = vector.shape_cast %122 : vector<1x32x8xbf16> to vector<32x8xbf16>
      %124 = vector.shape_cast %121 : vector<32x8xbf16> to vector<1x32x8xbf16>
      tpu.vector_store %arg7[%c4, %c0_71, %c0_72], %124 {strides = array<i32>} : memref<8x32x8xbf16, #tpu.memory_space<vmem>>, vector<1x32x8xbf16>,
      %125 = vector.extract_strided_slice %68 {offsets = [0, 96], sizes = [32, 8], strides = [1, 1]} : vector<32x192xbf16> to vector<32x8xbf16>
      %126 = tpu.transpose %125, [1, 0] : vector<32x8xbf16> -> vector<8x32xbf16>
      %c4_73 = arith.constant 4 : index
      %c0_74 = arith.constant 0 : index
      %c0_75 = arith.constant 0 : index
      %127 = vector.load %arg8[%c4_73, %c0_74, %c0_75] : memref<8x8x32xbf16, #tpu.memory_space<vmem>>, vector<1x8x32xbf16>
      %128 = vector.shape_cast %127 : vector<1x8x32xbf16> to vector<8x32xbf16>
      %129 = vector.shape_cast %126 : vector<8x32xbf16> to vector<1x8x32xbf16>
      tpu.vector_store %arg8[%c4_73, %c0_74, %c0_75], %129 {strides = array<i32>} : memref<8x8x32xbf16, #tpu.memory_space<vmem>>, vector<1x8x32xbf16>,
      %130 = vector.extract_strided_slice %68 {offsets = [0, 160], sizes = [32, 8], strides = [1, 1]} : vector<32x192xbf16> to vector<32x8xbf16>
      %c4_76 = arith.constant 4 : index
      %c0_77 = arith.constant 0 : index
      %c0_78 = arith.constant 0 : index
      %131 = vector.load %arg9[%c4_76, %c0_77, %c0_78] : memref<8x32x8xbf16, #tpu.memory_space<vmem>>, vector<1x32x8xbf16>
      %132 = vector.shape_cast %131 : vector<1x32x8xbf16> to vector<32x8xbf16>
      %133 = vector.shape_cast %130 : vector<32x8xbf16> to vector<1x32x8xbf16>
      tpu.vector_store %arg9[%c4_76, %c0_77, %c0_78], %133 {strides = array<i32>} : memref<8x32x8xbf16, #tpu.memory_space<vmem>>, vector<1x32x8xbf16>,
      %134 = vector.extract_strided_slice %68 {offsets = [0, 40], sizes = [32, 8], strides = [1, 1]} : vector<32x192xbf16> to vector<32x8xbf16>
      %c5 = arith.constant 5 : index
      %c0_79 = arith.constant 0 : index
      %c0_80 = arith.constant 0 : index
      %135 = vector.load %arg7[%c5, %c0_79, %c0_80] : memref<8x32x8xbf16, #tpu.memory_space<vmem>>, vector<1x32x8xbf16>
      %136 = vector.shape_cast %135 : vector<1x32x8xbf16> to vector<32x8xbf16>
      %137 = vector.shape_cast %134 : vector<32x8xbf16> to vector<1x32x8xbf16>
      tpu.vector_store %arg7[%c5, %c0_79, %c0_80], %137 {strides = array<i32>} : memref<8x32x8xbf16, #tpu.memory_space<vmem>>, vector<1x32x8xbf16>,
      %138 = vector.extract_strided_slice %68 {offsets = [0, 104], sizes = [32, 8], strides = [1, 1]} : vector<32x192xbf16> to vector<32x8xbf16>
      %139 = tpu.transpose %138, [1, 0] : vector<32x8xbf16> -> vector<8x32xbf16>
      %c5_81 = arith.constant 5 : index
      %c0_82 = arith.constant 0 : index
      %c0_83 = arith.constant 0 : index
      %140 = vector.load %arg8[%c5_81, %c0_82, %c0_83] : memref<8x8x32xbf16, #tpu.memory_space<vmem>>, vector<1x8x32xbf16>
      %141 = vector.shape_cast %140 : vector<1x8x32xbf16> to vector<8x32xbf16>
      %142 = vector.shape_cast %139 : vector<8x32xbf16> to vector<1x8x32xbf16>
      tpu.vector_store %arg8[%c5_81, %c0_82, %c0_83], %142 {strides = array<i32>} : memref<8x8x32xbf16, #tpu.memory_space<vmem>>, vector<1x8x32xbf16>,
      %143 = vector.extract_strided_slice %68 {offsets = [0, 168], sizes = [32, 8], strides = [1, 1]} : vector<32x192xbf16> to vector<32x8xbf16>
      %c5_84 = arith.constant 5 : index
      %c0_85 = arith.constant 0 : index
      %c0_86 = arith.constant 0 : index
      %144 = vector.load %arg9[%c5_84, %c0_85, %c0_86] : memref<8x32x8xbf16, #tpu.memory_space<vmem>>, vector<1x32x8xbf16>
      %145 = vector.shape_cast %144 : vector<1x32x8xbf16> to vector<32x8xbf16>
      %146 = vector.shape_cast %143 : vector<32x8xbf16> to vector<1x32x8xbf16>
      tpu.vector_store %arg9[%c5_84, %c0_85, %c0_86], %146 {strides = array<i32>} : memref<8x32x8xbf16, #tpu.memory_space<vmem>>, vector<1x32x8xbf16>,
      %147 = vector.extract_strided_slice %68 {offsets = [0, 48], sizes = [32, 8], strides = [1, 1]} : vector<32x192xbf16> to vector<32x8xbf16>
      %c6 = arith.constant 6 : index
      %c0_87 = arith.constant 0 : index
      %c0_88 = arith.constant 0 : index
      %148 = vector.load %arg7[%c6, %c0_87, %c0_88] : memref<8x32x8xbf16, #tpu.memory_space<vmem>>, vector<1x32x8xbf16>
      %149 = vector.shape_cast %148 : vector<1x32x8xbf16> to vector<32x8xbf16>
      %150 = vector.shape_cast %147 : vector<32x8xbf16> to vector<1x32x8xbf16>
      tpu.vector_store %arg7[%c6, %c0_87, %c0_88], %150 {strides = array<i32>} : memref<8x32x8xbf16, #tpu.memory_space<vmem>>, vector<1x32x8xbf16>,
      %151 = vector.extract_strided_slice %68 {offsets = [0, 112], sizes = [32, 8], strides = [1, 1]} : vector<32x192xbf16> to vector<32x8xbf16>
      %152 = tpu.transpose %151, [1, 0] : vector<32x8xbf16> -> vector<8x32xbf16>
      %c6_89 = arith.constant 6 : index
      %c0_90 = arith.constant 0 : index
      %c0_91 = arith.constant 0 : index
      %153 = vector.load %arg8[%c6_89, %c0_90, %c0_91] : memref<8x8x32xbf16, #tpu.memory_space<vmem>>, vector<1x8x32xbf16>
      %154 = vector.shape_cast %153 : vector<1x8x32xbf16> to vector<8x32xbf16>
      %155 = vector.shape_cast %152 : vector<8x32xbf16> to vector<1x8x32xbf16>
      tpu.vector_store %arg8[%c6_89, %c0_90, %c0_91], %155 {strides = array<i32>} : memref<8x8x32xbf16, #tpu.memory_space<vmem>>, vector<1x8x32xbf16>,
      %156 = vector.extract_strided_slice %68 {offsets = [0, 176], sizes = [32, 8], strides = [1, 1]} : vector<32x192xbf16> to vector<32x8xbf16>
      %c6_92 = arith.constant 6 : index
      %c0_93 = arith.constant 0 : index
      %c0_94 = arith.constant 0 : index
      %157 = vector.load %arg9[%c6_92, %c0_93, %c0_94] : memref<8x32x8xbf16, #tpu.memory_space<vmem>>, vector<1x32x8xbf16>
      %158 = vector.shape_cast %157 : vector<1x32x8xbf16> to vector<32x8xbf16>
      %159 = vector.shape_cast %156 : vector<32x8xbf16> to vector<1x32x8xbf16>
      tpu.vector_store %arg9[%c6_92, %c0_93, %c0_94], %159 {strides = array<i32>} : memref<8x32x8xbf16, #tpu.memory_space<vmem>>, vector<1x32x8xbf16>,
      %160 = vector.extract_strided_slice %68 {offsets = [0, 56], sizes = [32, 8], strides = [1, 1]} : vector<32x192xbf16> to vector<32x8xbf16>
      %c7 = arith.constant 7 : index
      %c0_95 = arith.constant 0 : index
      %c0_96 = arith.constant 0 : index
      %161 = vector.load %arg7[%c7, %c0_95, %c0_96] : memref<8x32x8xbf16, #tpu.memory_space<vmem>>, vector<1x32x8xbf16>
      %162 = vector.shape_cast %161 : vector<1x32x8xbf16> to vector<32x8xbf16>
      %163 = vector.shape_cast %160 : vector<32x8xbf16> to vector<1x32x8xbf16>
      tpu.vector_store %arg7[%c7, %c0_95, %c0_96], %163 {strides = array<i32>} : memref<8x32x8xbf16, #tpu.memory_space<vmem>>, vector<1x32x8xbf16>,
      %164 = vector.extract_strided_slice %68 {offsets = [0, 120], sizes = [32, 8], strides = [1, 1]} : vector<32x192xbf16> to vector<32x8xbf16>
      %165 = tpu.transpose %164, [1, 0] : vector<32x8xbf16> -> vector<8x32xbf16>
      %c7_97 = arith.constant 7 : index
      %c0_98 = arith.constant 0 : index
      %c0_99 = arith.constant 0 : index
      %166 = vector.load %arg8[%c7_97, %c0_98, %c0_99] : memref<8x8x32xbf16, #tpu.memory_space<vmem>>, vector<1x8x32xbf16>
      %167 = vector.shape_cast %166 : vector<1x8x32xbf16> to vector<8x32xbf16>
      %168 = vector.shape_cast %165 : vector<8x32xbf16> to vector<1x8x32xbf16>
      tpu.vector_store %arg8[%c7_97, %c0_98, %c0_99], %168 {strides = array<i32>} : memref<8x8x32xbf16, #tpu.memory_space<vmem>>, vector<1x8x32xbf16>,
      %169 = vector.extract_strided_slice %68 {offsets = [0, 184], sizes = [32, 8], strides = [1, 1]} : vector<32x192xbf16> to vector<32x8xbf16>
      %c7_100 = arith.constant 7 : index
      %c0_101 = arith.constant 0 : index
      %c0_102 = arith.constant 0 : index
      %170 = vector.load %arg9[%c7_100, %c0_101, %c0_102] : memref<8x32x8xbf16, #tpu.memory_space<vmem>>, vector<1x32x8xbf16>
      %171 = vector.shape_cast %170 : vector<1x32x8xbf16> to vector<32x8xbf16>
      %172 = vector.shape_cast %169 : vector<32x8xbf16> to vector<1x32x8xbf16>
      tpu.vector_store %arg9[%c7_100, %c0_101, %c0_102], %172 {strides = array<i32>} : memref<8x32x8xbf16, #tpu.memory_space<vmem>>, vector<1x32x8xbf16>,
    } else {
    }
    %c16_i32 = arith.constant 16 : i32
    %3 = arith.muli %arg1, %c16_i32 : i32
    %4 = tpu.assume_multiple %3, 16 : i32
    %c0 = arith.constant 0 : index
    %5 = arith.index_cast %4 : i32 to index
    %c0_1 = arith.constant 0 : index
    %6 = vector.load %arg7[%c0, %5, %c0_1] : memref<8x32x8xbf16, #tpu.memory_space<vmem>>, vector<8x16x8xbf16>
    %c0_2 = arith.constant 0 : index
    %c0_3 = arith.constant 0 : index
    %c0_4 = arith.constant 0 : index
    %7 = vector.load %arg8[%c0_2, %c0_3, %c0_4] : memref<8x8x32xbf16, #tpu.memory_space<vmem>>, vector<8x8x32xbf16>
    "tpu.trace_start"() <{level = 10 : i32, message = "hqd,hdn->hqn"}> : () -> ()
    %cst = arith.constant dense<0.000000e+00> : vector<8x16x32xf32>
    %8 = tpu.matmul %6, %7, %cst {dimension_numbers = #tpu.dot_dimension_numbers<[2], [1], [1], [2], [0, 0, 0, 1, 1, 2], [0], [0]>} : vector<8x16x8xbf16>, vector<8x8x32xbf16>, vector<8x16x32xf32> -> vector<8x16x32xf32>
    "tpu.trace_stop"() : () -> ()
    %cst_5 = arith.constant dense<0xFF800000> : vector<8x16xf32>
    %9 = vector.multi_reduction <maximumf>, %8, %cst_5 [2] : vector<8x16x32xf32> to vector<8x16xf32>
    %10 = vector.shape_cast %9 : vector<8x16xf32> to vector<8x16x1xf32>
    %11 = vector.broadcast %10 : vector<8x16x1xf32> to vector<8x16x32xf32>
    %12 = arith.subf %8, %11 : vector<8x16x32xf32>
    %13 = math.exp %12 : vector<8x16x32xf32>
    %cst_6 = arith.constant dense<0.000000e+00> : vector<8x16xf32>
    %14 = vector.multi_reduction <add>, %13, %cst_6 [2] : vector<8x16x32xf32> to vector<8x16xf32>
    %15 = vector.shape_cast %14 : vector<8x16xf32> to vector<8x16x1xf32>
    %16 = tpu.reciprocal %15 {approx = true} : vector<8x16x1xf32> -> vector<8x16x1xf32>
    %17 = vector.broadcast %16 : vector<8x16x1xf32> to vector<8x16x32xf32>
    %18 = arith.mulf %13, %17 : vector<8x16x32xf32>
    %19 = arith.truncf %18 : vector<8x16x32xf32> to vector<8x16x32xbf16>
    %c0_7 = arith.constant 0 : index
    %c0_8 = arith.constant 0 : index
    %c0_9 = arith.constant 0 : index
    %c0_10 = arith.constant 0 : index
    %20 = vector.load %arg6[%c0_7, %c0_8, %c0_9, %c0_10] : memref<1x8x16x32xbf16, #tpu.memory_space<vmem>>, vector<1x8x16x32xbf16>
    %21 = vector.shape_cast %20 : vector<1x8x16x32xbf16> to vector<8x16x32xbf16>
    %22 = vector.shape_cast %19 : vector<8x16x32xbf16> to vector<1x8x16x32xbf16>
    tpu.vector_store %arg6[%c0_7, %c0_8, %c0_9, %c0_10], %22 {strides = array<i32>} : memref<1x8x16x32xbf16, #tpu.memory_space<vmem>>, vector<1x8x16x32xbf16>,
    %23 = arith.truncf %18 : vector<8x16x32xf32> to vector<8x16x32xbf16>
    %c0_11 = arith.constant 0 : index
    %c0_12 = arith.constant 0 : index
    %c0_13 = arith.constant 0 : index
    %24 = vector.load %arg9[%c0_11, %c0_12, %c0_13] : memref<8x32x8xbf16, #tpu.memory_space<vmem>>, vector<8x32x8xbf16>
    "tpu.trace_start"() <{level = 10 : i32, message = "hqn,hnd->hqd"}> : () -> ()
    %cst_14 = arith.constant dense<0.000000e+00> : vector<8x16x8xf32>
    %25 = tpu.matmul %23, %24, %cst_14 {dimension_numbers = #tpu.dot_dimension_numbers<[2], [1], [1], [2], [0, 0, 0, 1, 1, 2], [0], [0]>} : vector<8x16x32xbf16>, vector<8x32x8xbf16>, vector<8x16x8xf32> -> vector<8x16x8xf32>
    "tpu.trace_stop"() : () -> ()
    %26 = vector.extract_strided_slice %25 {offsets = [0, 0, 0], sizes = [1, 16, 8], strides = [1, 1, 1]} : vector<8x16x8xf32> to vector<1x16x8xf32>
    %27 = vector.shape_cast %26 : vector<1x16x8xf32> to vector<16x8xf32>
    %28 = arith.truncf %27 : vector<16x8xf32> to vector<16x8xbf16>
    %c0_15 = arith.constant 0 : index
    %c0_16 = arith.constant 0 : index
    %29 = vector.load %arg10[%c0_15, %c0_16] : memref<16x64xbf16, #tpu.memory_space<vmem>>, vector<16x8xbf16>
    tpu.vector_store %arg10[%c0_15, %c0_16], %28 {strides = array<i32>} : memref<16x64xbf16, #tpu.memory_space<vmem>>, vector<16x8xbf16>,
    %30 = vector.extract_strided_slice %25 {offsets = [1, 0, 0], sizes = [1, 16, 8], strides = [1, 1, 1]} : vector<8x16x8xf32> to vector<1x16x8xf32>
    %31 = vector.shape_cast %30 : vector<1x16x8xf32> to vector<16x8xf32>
    %32 = arith.truncf %31 : vector<16x8xf32> to vector<16x8xbf16>
    %c0_17 = arith.constant 0 : index
    %c8 = arith.constant 8 : index
    %33 = vector.load %arg10[%c0_17, %c8] : memref<16x64xbf16, #tpu.memory_space<vmem>>, vector<16x8xbf16>
    tpu.vector_store %arg10[%c0_17, %c8], %32 {strides = array<i32>} : memref<16x64xbf16, #tpu.memory_space<vmem>>, vector<16x8xbf16>,
    %34 = vector.extract_strided_slice %25 {offsets = [2, 0, 0], sizes = [1, 16, 8], strides = [1, 1, 1]} : vector<8x16x8xf32> to vector<1x16x8xf32>
    %35 = vector.shape_cast %34 : vector<1x16x8xf32> to vector<16x8xf32>
    %36 = arith.truncf %35 : vector<16x8xf32> to vector<16x8xbf16>
    %c0_18 = arith.constant 0 : index
    %c16 = arith.constant 16 : index
    %37 = vector.load %arg10[%c0_18, %c16] : memref<16x64xbf16, #tpu.memory_space<vmem>>, vector<16x8xbf16>
    tpu.vector_store %arg10[%c0_18, %c16], %36 {strides = array<i32>} : memref<16x64xbf16, #tpu.memory_space<vmem>>, vector<16x8xbf16>,
    %38 = vector.extract_strided_slice %25 {offsets = [3, 0, 0], sizes = [1, 16, 8], strides = [1, 1, 1]} : vector<8x16x8xf32> to vector<1x16x8xf32>
    %39 = vector.shape_cast %38 : vector<1x16x8xf32> to vector<16x8xf32>
    %40 = arith.truncf %39 : vector<16x8xf32> to vector<16x8xbf16>
    %c0_19 = arith.constant 0 : index
    %c24 = arith.constant 24 : index
    %41 = vector.load %arg10[%c0_19, %c24] : memref<16x64xbf16, #tpu.memory_space<vmem>>, vector<16x8xbf16>
    tpu.vector_store %arg10[%c0_19, %c24], %40 {strides = array<i32>} : memref<16x64xbf16, #tpu.memory_space<vmem>>, vector<16x8xbf16>,
    %42 = vector.extract_strided_slice %25 {offsets = [4, 0, 0], sizes = [1, 16, 8], strides = [1, 1, 1]} : vector<8x16x8xf32> to vector<1x16x8xf32>
    %43 = vector.shape_cast %42 : vector<1x16x8xf32> to vector<16x8xf32>
    %44 = arith.truncf %43 : vector<16x8xf32> to vector<16x8xbf16>
    %c0_20 = arith.constant 0 : index
    %c32 = arith.constant 32 : index
    %45 = vector.load %arg10[%c0_20, %c32] : memref<16x64xbf16, #tpu.memory_space<vmem>>, vector<16x8xbf16>
    tpu.vector_store %arg10[%c0_20, %c32], %44 {strides = array<i32>} : memref<16x64xbf16, #tpu.memory_space<vmem>>, vector<16x8xbf16>,
    %46 = vector.extract_strided_slice %25 {offsets = [5, 0, 0], sizes = [1, 16, 8], strides = [1, 1, 1]} : vector<8x16x8xf32> to vector<1x16x8xf32>
    %47 = vector.shape_cast %46 : vector<1x16x8xf32> to vector<16x8xf32>
    %48 = arith.truncf %47 : vector<16x8xf32> to vector<16x8xbf16>
    %c0_21 = arith.constant 0 : index
    %c40 = arith.constant 40 : index
    %49 = vector.load %arg10[%c0_21, %c40] : memref<16x64xbf16, #tpu.memory_space<vmem>>, vector<16x8xbf16>
    tpu.vector_store %arg10[%c0_21, %c40], %48 {strides = array<i32>} : memref<16x64xbf16, #tpu.memory_space<vmem>>, vector<16x8xbf16>,
    %50 = vector.extract_strided_slice %25 {offsets = [6, 0, 0], sizes = [1, 16, 8], strides = [1, 1, 1]} : vector<8x16x8xf32> to vector<1x16x8xf32>
    %51 = vector.shape_cast %50 : vector<1x16x8xf32> to vector<16x8xf32>
    %52 = arith.truncf %51 : vector<16x8xf32> to vector<16x8xbf16>
    %c0_22 = arith.constant 0 : index
    %c48 = arith.constant 48 : index
    %53 = vector.load %arg10[%c0_22, %c48] : memref<16x64xbf16, #tpu.memory_space<vmem>>, vector<16x8xbf16>
    tpu.vector_store %arg10[%c0_22, %c48], %52 {strides = array<i32>} : memref<16x64xbf16, #tpu.memory_space<vmem>>, vector<16x8xbf16>,
    %54 = vector.extract_strided_slice %25 {offsets = [7, 0, 0], sizes = [1, 16, 8], strides = [1, 1, 1]} : vector<8x16x8xf32> to vector<1x16x8xf32>
    %55 = vector.shape_cast %54 : vector<1x16x8xf32> to vector<16x8xf32>
    %56 = arith.truncf %55 : vector<16x8xf32> to vector<16x8xbf16>
    %c0_23 = arith.constant 0 : index
    %c56 = arith.constant 56 : index
    %57 = vector.load %arg10[%c0_23, %c56] : memref<16x64xbf16, #tpu.memory_space<vmem>>, vector<16x8xbf16>
    tpu.vector_store %arg10[%c0_23, %c56], %56 {strides = array<i32>} : memref<16x64xbf16, #tpu.memory_space<vmem>>, vector<16x8xbf16>,
    %c0_24 = arith.constant 0 : index
    %c0_25 = arith.constant 0 : index
    %58 = vector.load %arg10[%c0_24, %c0_25] : memref<16x64xbf16, #tpu.memory_space<vmem>>, vector<16x64xbf16>
    %c0_26 = arith.constant 0 : index
    %c0_27 = arith.constant 0 : index
    %59 = vector.load %arg4[%c0_26, %c0_27] : memref<64x64xbf16, #tpu.memory_space<vmem>>, vector<64x64xbf16>
    %cst_28 = arith.constant dense<0.000000e+00> : vector<16x64xf32>
    %60 = tpu.matmul %58, %59, %cst_28 {dimension_numbers = #tpu.dot_dimension_numbers<[1], [0], [0], [1], [0, 0, 1, 1], [], []>} : vector<16x64xbf16>, vector<64x64xbf16>, vector<16x64xf32> -> vector<16x64xf32>
    %c0_29 = arith.constant 0 : index
    %c0_30 = arith.constant 0 : index
    %c0_31 = arith.constant 0 : index
    %61 = vector.load %arg5[%c0_29, %c0_30, %c0_31] : memref<1x16x64xf32, #tpu.memory_space<vmem>>, vector<1x16x64xf32>
    %62 = vector.shape_cast %61 : vector<1x16x64xf32> to vector<16x64xf32>
    %63 = vector.shape_cast %60 : vector<16x64xf32> to vector<1x16x64xf32>
    tpu.vector_store %arg5[%c0_29, %c0_30, %c0_31], %63 {strides = array<i32>} : memref<1x16x64xf32, #tpu.memory_space<vmem>>, vector<1x16x64xf32>,
    return
  }
  func.func @transform_0(%arg0: i32, %arg1: i32) -> (i32, i32, i32) {
    %c0_i32 = arith.constant 0 : i32
    %c0_i32_0 = arith.constant 0 : i32
    %c0_i32_1 = arith.constant 0 : i32
    return %arg0, %c0_i32, %c0_i32_0 : i32, i32, i32
  }
  func.func @transform_1(%arg0: i32, %arg1: i32) -> (i32, i32) {
    %c0_i32 = arith.constant 0 : i32
    %c0_i32_0 = arith.constant 0 : i32
    %c0_i32_1 = arith.constant 0 : i32
    return %c0_i32, %c0_i32_0 : i32, i32
  }
  func.func @transform_2(%arg0: i32, %arg1: i32) -> (i32, i32) {
    %c0_i32 = arith.constant 0 : i32
    %c0_i32_0 = arith.constant 0 : i32
    %c0_i32_1 = arith.constant 0 : i32
    return %c0_i32, %c0_i32_0 : i32, i32
  }
  func.func @transform_3(%arg0: i32, %arg1: i32) -> (i32, i32, i32) {
    %c0_i32 = arith.constant 0 : i32
    %c0_i32_0 = arith.constant 0 : i32
    return %arg0, %arg1, %c0_i32 : i32, i32, i32
  }
  func.func @transform_4(%arg0: i32, %arg1: i32) -> (i32, i32, i32, i32) {
    %c0_i32 = arith.constant 0 : i32
    %c0_i32_0 = arith.constant 0 : i32
    %c0_i32_1 = arith.constant 0 : i32
    return %arg0, %c0_i32, %arg1, %c0_i32_0 : i32, i32, i32, i32
  }
}

</mosaic_0001>

<llo_original>
// kernel: tpu_custom_call.1
$region0: #{tpu_custom_call.1}
  #allocation0 [shape = 'u32[]', space=smem, size = 0x4, offset = 0x4, fixed_abs, tag = 'smem constant byte address 0x4 - core index']
  #allocation1 [shape = 'u32[144,128]{1,0:T(1,128)}', space=vmem, size = 0x12000, scoped, tag = 'internal scratch']
  #allocation2 [shape = 'bf16[8,32,8]{2,1,0:T(8,128)(2,1)}', space=vmem, size = 0x10000, scoped, tag = 'scratch operand']
  #allocation3 [shape = 'bf16[8,8,32]{2,1,0:T(8,128)(2,1)}', space=vmem, size = 0x4000, scoped, tag = 'scratch operand']
  #allocation4 [shape = 'bf16[8,32,8]{2,1,0:T(8,128)(2,1)}', space=vmem, size = 0x10000, scoped, tag = 'scratch operand']
  #allocation5 [shape = 'bf16[16,64]{1,0:T(8,128)(2,1)}', space=vmem, size = 0x1000, scoped, tag = 'scratch operand']
  #allocation15 [shape = 's32[]', space=sflag, size = 0x4, offset = 0, fixed_abs, tag = 'sflag constant byte address 0x0 - dummy sync flag']
  %s0 = inlined_call_operand.hbm [shape: bf16[2,32,64], index: 0, kind: input, shape index: {}]
  %s1 = inlined_call_operand.hbm [shape: bf16[64,192], index: 1, kind: input, shape index: {}]
  %s2 = inlined_call_operand.hbm [shape: bf16[64,64], index: 2, kind: input, shape index: {}]
  %s3 = inlined_call_operand.hbm [shape: f32[2,32,64], index: 3, kind: output, shape index: {0}]
  %s4 = inlined_call_operand.hbm [shape: bf16[2,8,32,32], index: 4, kind: output, shape index: {1}]
  %5 = xla_tuple %s3, %s4
  %s6 = sld [smem:[#allocation0]]
  $region69: #{tpu_custom_call.1} parent=0
    _
  %s8 = ssub.s32 1, %s6
  %s9 = scalar_select 0, %s8, %s6
  $region1: #{tpu_custom_call.1} parent=0
    #allocation6 [shape = 'u8[16384]{0}', space=vmem, size = 0x4000, scoped, tag = 'input window, operand 0']
    #allocation7 [shape = 's32[2]{0}', space=sflag, size = 0x8, scoped, tag = 'scoped memory for tpu_custom_call.1']
    #allocation8 [shape = 's32[2]{0}', space=sflag, size = 0x8, scoped, tag = 'scoped memory for tpu_custom_call.1']
    #allocation9 [shape = 'u8[32768]{0}', space=vmem, size = 0x8000, scoped, tag = 'input window, operand 1, single buffered']
    #allocation10 [shape = 's32[1]{0}', space=sflag, size = 0x4, scoped, tag = 'scoped memory for tpu_custom_call.1']
    #allocation11 [shape = 'u8[16384]{0}', space=vmem, size = 0x4000, scoped, tag = 'input window, operand 2, single buffered']
    #allocation12 [shape = 'u8[16384]{0}', space=vmem, size = 0x4000, scoped, tag = 'output window, operand 0']
    #allocation13 [shape = 'u8[65536]{0}', space=vmem, size = 0x10000, scoped, tag = 'output window, operand 1']
    #allocation14 [shape = 's32[2]{0}', space=sflag, size = 0x8, scoped, tag = 'scoped memory for tpu_custom_call.1']
    %10 = vsyncpa [#allocation7], 0
    %s11 = scalar_lea.sflag [#allocation7], 1
    %12 = vsyncpa %s11, 0
    %13 = vsyncpa [#allocation10], 0
    %14 = vsyncpa [#allocation8], 0
    %s15 = scalar_lea.sflag [#allocation8], 1
    %16 = vsyncpa %s15, 0
    %17 = vsyncpa [#allocation14], 0
    %s18 = scalar_lea.sflag [#allocation14], 1
    %19 = vsyncpa %s18, 0
    loop: start=0, step=1, limit=6
    $region2: #{tpu_custom_call.1} parent=1 // loop_pre_header
      _
    $region3: #{tpu_custom_call.1} parent=1 // loop_header
      %s21 = sphi 0, %s25
      %p22 = scmp.ge.s32.totalorder %s21, 6
      %s28 = sphi 0, %s40
      %s29 = sphi 0, %s36
      %s30 = sphi 0, %s28
      %s31 = sphi 0, %s29
      %s32 = sphi 0, %s30
      %s33 = sphi 0, %s31
      %s43 = sphi 0, %s45
      %s46 = sphi 0, %s43
      %s47 = sphi 0, %s46
      %s63 = sphi 0, %s47
      %s67 = sphi 0, %s67
      %s69 = sphi 0, %s67
      %s70 = sphi 0, %s69
      %s84 = sphi 0, %s70
      %s88 = sphi 0, %s88
      %s90 = sphi 0, %s88
      %s91 = sphi 0, %s90
      %s105 = sphi 0, %s91
      %s113 = sphi 0, %s115
      %s116 = sphi 0, %s113
      %s117 = sphi 0, %s116
      %s133 = sphi 0, %s117
      %s141 = sphi 0, %s143
      %s144 = sphi 0, %s141
      %s145 = sphi 0, %s144
      %s161 = sphi 0, %s145
    $region4: #{tpu_custom_call.1} parent=1 // loop_header_branch
      %24 = sbr.rel (%p22) target = $region8
    $region5: #{tpu_custom_call.1} parent=1 // loop_body
      %s26 = ssub.s32 %s21, 1
      %s27 = ssub.s32 %s21, 2
      %s34 = sadd.s32 1, %s29
      %p35 = scmp.ge.s32.totalorder %s34, 2
      %s36 = scalar_select %p35, 0, %s34
      %s37 = sadd.s32 1, %s28
      %s38 = scalar_select %p35, %s37, %s28
      %p39 = scmp.ge.s32.totalorder %s38, 2
      %s40 = scalar_select %p39, 0, %s38
      %s41 = ssub.s32 %s28, %s40
      %p42 = scmp.eq.s32.totalorder %s41, 0
      %s44 = sadd.s32 %s43, 1
      %s45 = scalar_select %p42, %s43, %s44
      %p48 = pneg %p42
      %p49 = scmp.eq.s32.totalorder %s21, 3
      %p50 = por %p48, %p49
      %p51 = scmp.ne.s32.totalorder %s43, %s46
      %p52 = scmp.eq.s32.totalorder %s21, 0
      %p53 = por %p51, %p52
      %p54 = scmp.ne.s32.totalorder %s43, %s46
      %p55 = scmp.eq.s32.totalorder %s26, 3
      %p56 = por %p54, %p55
      %p57 = scmp.ne.s32.totalorder %s46, %s47
      %p58 = scmp.eq.s32.totalorder %s26, 0
      %p59 = por %p57, %p58
      %p60 = scmp.ne.s32.totalorder %s46, %s47
      %p61 = scmp.eq.s32.totalorder %s27, 3
      %p62 = por %p60, %p61
      %p64 = scmp.ne.s32.totalorder %s47, %s63
      %p65 = scmp.eq.s32.totalorder %s27, 0
      %p66 = por %p64, %p65
      %s68 = sadd.s32 %s67, 1
      %p71 = scmp.eq.s32.totalorder %s21, 3
      %p72 = scmp.ne.s32.totalorder %s67, %s69
      %p73 = scmp.eq.s32.totalorder %s21, 0
      %p74 = por %p72, %p73
      %p75 = scmp.ne.s32.totalorder %s67, %s69
      %p76 = scmp.eq.s32.totalorder %s26, 3
      %p77 = por %p75, %p76
      %p78 = scmp.ne.s32.totalorder %s69, %s70
      %p79 = scmp.eq.s32.totalorder %s26, 0
      %p80 = por %p78, %p79
      %p81 = scmp.ne.s32.totalorder %s69, %s70
      %p82 = scmp.eq.s32.totalorder %s27, 3
      %p83 = por %p81, %p82
      %p85 = scmp.ne.s32.totalorder %s70, %s84
      %p86 = scmp.eq.s32.totalorder %s27, 0
      %p87 = por %p85, %p86
      %s89 = sadd.s32 %s88, 1
      %p92 = scmp.eq.s32.totalorder %s21, 3
      %p93 = scmp.ne.s32.totalorder %s88, %s90
      %p94 = scmp.eq.s32.totalorder %s21, 0
      %p95 = por %p93, %p94
      %p96 = scmp.ne.s32.totalorder %s88, %s90
      %p97 = scmp.eq.s32.totalorder %s26, 3
      %p98 = por %p96, %p97
      %p99 = scmp.ne.s32.totalorder %s90, %s91
      %p100 = scmp.eq.s32.totalorder %s26, 0
      %p101 = por %p99, %p100
      %p102 = scmp.ne.s32.totalorder %s90, %s91
      %p103 = scmp.eq.s32.totalorder %s27, 3
      %p104 = por %p102, %p103
      %p106 = scmp.ne.s32.totalorder %s91, %s105
      %p107 = scmp.eq.s32.totalorder %s27, 0
      %p108 = por %p106, %p107
      %s109 = ssub.s32 %s28, %s40
      %s110 = ssub.s32 %s29, %s36
      %s111 = sor.u32 %s109, %s110
      %p112 = scmp.eq.s32.totalorder %s111, 0
      %s114 = sadd.s32 %s113, 1
      %s115 = scalar_select %p112, %s113, %s114
      %p118 = pneg %p112
      %p119 = scmp.eq.s32.totalorder %s21, 3
      %p120 = por %p118, %p119
      %p121 = scmp.ne.s32.totalorder %s113, %s116
      %p122 = scmp.eq.s32.totalorder %s21, 0
      %p123 = por %p121, %p122
      %p124 = scmp.ne.s32.totalorder %s113, %s116
      %p125 = scmp.eq.s32.totalorder %s26, 3
      %p126 = por %p124, %p125
      %p127 = scmp.ne.s32.totalorder %s116, %s117
      %p128 = scmp.eq.s32.totalorder %s26, 0
      %p129 = por %p127, %p128
      %p130 = scmp.ne.s32.totalorder %s116, %s117
      %p131 = scmp.eq.s32.totalorder %s27, 3
      %p132 = por %p130, %p131
      %p134 = scmp.ne.s32.totalorder %s117, %s133
      %p135 = scmp.eq.s32.totalorder %s27, 0
      %p136 = por %p134, %p135
      %s137 = ssub.s32 %s28, %s40
      %s138 = ssub.s32 %s29, %s36
      %s139 = sor.u32 %s137, %s138
      %p140 = scmp.eq.s32.totalorder %s139, 0
      %s142 = sadd.s32 %s141, 1
      %s143 = scalar_select %p140, %s141, %s142
      %p146 = pneg %p140
      %p147 = scmp.eq.s32.totalorder %s21, 3
      %p148 = por %p146, %p147
      %p149 = scmp.ne.s32.totalorder %s141, %s144
      %p150 = scmp.eq.s32.totalorder %s21, 0
      %p151 = por %p149, %p150
      %p152 = scmp.ne.s32.totalorder %s141, %s144
      %p153 = scmp.eq.s32.totalorder %s26, 3
      %p154 = por %p152, %p153
      %p155 = scmp.ne.s32.totalorder %s144, %s145
      %p156 = scmp.eq.s32.totalorder %s26, 0
      %p157 = por %p155, %p156
      %p158 = scmp.ne.s32.totalorder %s144, %s145
      %p159 = scmp.eq.s32.totalorder %s27, 3
      %p160 = por %p158, %p159
      %p162 = scmp.ne.s32.totalorder %s145, %s161
      %p163 = scmp.eq.s32.totalorder %s27, 0
      %p164 = por %p162, %p163
      %p165 = scmp.le.s32.totalorder 1, %s21
      %p166 = scmp.lt.s32.totalorder %s21, 5
      %p167 = pnand %p165, %p166
      %p168 = pneg %p167
      // Predicated region
      $region9: #{tpu_custom_call.1} parent=5 // pred_check
        _
      $region10: #{tpu_custom_call.1} parent=5 // pred_check_branch
        %170 = sbr.rel (%p167) target = $region12
      $region11: #{tpu_custom_call.1} parent=5 // pred_region
        %s171 = ssub.s32 %s21, 1
        // Predicated region
        $region13: #{tpu_custom_call.1} parent=11 // pred_check
          %p172 = pneg %p80
        $region14: #{tpu_custom_call.1} parent=11 // pred_check_branch
          %174 = sbr.rel (%p172) target = $region16
        $region15: #{tpu_custom_call.1} parent=11 // pred_region
          %s176 = ssub.s32 1024, 1024
          %177 = vsyncadd [#allocation10], %s176
          %s178 = sshll.u32 [#allocation9], 4
          %s179 = int_to_ptr.vmem [resolvable:$true] %s178
          %184 = dma.hbm_to_vmem [thread:$0]  %s1, 1024, %s179, [#allocation10], 128, 128, 8
        $region16: #{tpu_custom_call.1} parent=11 // pred_fallthru
          _
        // Predicated region
        $region17: #{tpu_custom_call.1} parent=11 // pred_check
          %p185 = pneg %p101
        $region18: #{tpu_custom_call.1} parent=11 // pred_check_branch
          %187 = sbr.rel (%p185) target = $region20
        $region19: #{tpu_custom_call.1} parent=11 // pred_region
          %s189 = ssub.s32 512, 512
          %190 = vsyncadd [#allocation10], %s189
          %s191 = sshll.u32 [#allocation11], 4
          %s192 = int_to_ptr.vmem [resolvable:$true] %s191
          %197 = dma.hbm_to_vmem [thread:$0]  %s2, 512, %s192, [#allocation10], 64, 64, 4
        $region20: #{tpu_custom_call.1} parent=11 // pred_fallthru
          _
      $region12: #{tpu_custom_call.1} parent=5 // pred_fallthru
        _
      %p198 = scmp.lt.s32.totalorder %s21, 4
      // Predicated region
      $region21: #{tpu_custom_call.1} parent=5 // pred_check
        %p199 = pneg %p198
      $region22: #{tpu_custom_call.1} parent=5 // pred_check_branch
        %201 = sbr.rel (%p199) target = $region24
      $region23: #{tpu_custom_call.1} parent=5 // pred_region
        // Predicated region
        $region25: #{tpu_custom_call.1} parent=23 // pred_check
          %p202 = pneg %p53
        $region26: #{tpu_custom_call.1} parent=23 // pred_check_branch
          %204 = sbr.rel (%p202) target = $region28
        $region27: #{tpu_custom_call.1} parent=23 // pred_region
          %s205 = sand.u32 %s43, 1
          %s206 = scalar_lea.sflag [#allocation7], %s205
          %s207 = sand.u32 %s43, 1
          %s208 = smul.addr %s207, 16
          %s209 = scalar_lea.vmem [#allocation6], %s208
          %s211 = ssub.s32 256, 256
          %212 = vsyncadd %s206, %s211
          %s213 = smul.addr %s28, 4
          %s214 = smul.addr %s213, 64
          %s215 = scalar_lea.hbm %s0, %s214
          %s216 = sshll.u32 %s209, 4
          %s217 = int_to_ptr.vmem [resolvable:$true] %s216
          %222 = dma.hbm_to_vmem [thread:$0]  %s215, 256, %s217, %s206, 64, 64, 4
        $region28: #{tpu_custom_call.1} parent=23 // pred_fallthru
          _
      $region24: #{tpu_custom_call.1} parent=5 // pred_fallthru
        _
      %p223 = scmp.le.s32.totalorder 1, %s21
      %p224 = scmp.lt.s32.totalorder %s21, 5
      %p225 = pnand %p223, %p224
      %p226 = pneg %p225
      // Predicated region
      $region29: #{tpu_custom_call.1} parent=5 // pred_check
        _
      $region30: #{tpu_custom_call.1} parent=5 // pred_check_branch
        %228 = sbr.rel (%p225) target = $region32
      $region31: #{tpu_custom_call.1} parent=5 // pred_region
        %s229 = ssub.s32 %s21, 1
        %s230 = sand.u32 %s46, 1
        %s231 = scalar_lea.sflag [#allocation7], %s230
        %s232 = sand.u32 %s46, 1
        %s233 = smul.addr %s232, 16
        %s234 = scalar_lea.vmem [#allocation6], %s233
        // Predicated region
        $region33: #{tpu_custom_call.1} parent=31 // pred_check
          %p235 = pneg %p59
        $region34: #{tpu_custom_call.1} parent=31 // pred_check_branch
          %237 = sbr.rel (%p235) target = $region36
        $region35: #{tpu_custom_call.1} parent=31 // pred_region
          %238 = dma.done %s231, 256
        $region36: #{tpu_custom_call.1} parent=31 // pred_fallthru
          _
        // Predicated region
        $region37: #{tpu_custom_call.1} parent=31 // pred_check
          %p239 = pneg %p80
        $region38: #{tpu_custom_call.1} parent=31 // pred_check_branch
          %241 = sbr.rel (%p239) target = $region40
        $region39: #{tpu_custom_call.1} parent=31 // pred_region
          %242 = dma.done [#allocation10], 1024
        $region40: #{tpu_custom_call.1} parent=31 // pred_fallthru
          _
        // Predicated region
        $region41: #{tpu_custom_call.1} parent=31 // pred_check
          %p243 = pneg %p101
        $region42: #{tpu_custom_call.1} parent=31 // pred_check_branch
          %245 = sbr.rel (%p243) target = $region44
        $region43: #{tpu_custom_call.1} parent=31 // pred_region
          %246 = dma.done [#allocation10], 512
        $region44: #{tpu_custom_call.1} parent=31 // pred_fallthru
          _
        %s247 = sand.u32 %s46, 1
        %s248 = scalar_lea.sflag [#allocation7], %s247
        %s249 = sand.u32 %s46, 1
        %s250 = smul.addr %s249, 16
        %s251 = scalar_lea.vmem [#allocation6], %s250
        %p252 = pneg %p59
        %p253 = pneg %p56
        %p254 = pneg %p80
        %p255 = pneg %p77
        %p256 = pneg %p101
        %p257 = pneg %p98
        %p258 = pneg %p129
        %p259 = pneg %p126
        %s260 = sand.u32 %s116, 1
        %s261 = scalar_lea.sflag [#allocation8], %s260
        %s262 = sand.u32 %s116, 1
        %s263 = smul.addr %s262, 16
        %s264 = scalar_lea.vmem [#allocation12], %s263
        %p265 = pneg %p157
        %p266 = pneg %p154
        %s267 = sand.u32 %s144, 1
        %s268 = scalar_lea.sflag [#allocation14], %s267
        %s269 = sand.u32 %s144, 1
        %s270 = smul.addr %s269, 64
        %s271 = scalar_lea.vmem [#allocation13], %s270
        %s272 = smul.u32 2, %s31
        %s273 = smul.u32 2, %s31
        %p275 = scmp.eq.s32.totalorder %s31, 0
        // Predicated region
        $region45: #{tpu_custom_call.1} parent=31 // pred_check
          %p276 = pneg %p275
        $region46: #{tpu_custom_call.1} parent=31 // pred_check_branch
          %278 = sbr.rel (%p276) target = $region48
        $region47: #{tpu_custom_call.1} parent=31 // pred_region
          %v279 = vld [vmem:[%s234] sm:$0xf]
          %v280 = vld [vmem:[%s234 + $0x4] sm:$0xf]
          %v281 = vld [vmem:[%s234 + $0x8] sm:$0xf]
          %v282 = vld [vmem:[%s234 + $0xc] sm:$0xf]
          %v283 = vld [vmem:[#allocation9] sm:$0xff]
          %v284 = vld [vmem:[#allocation9 + $0x8] sm:$0xff]
          %v285 = vld [vmem:[#allocation9 + $0x10] sm:$0xff]
          %v286 = vld [vmem:[#allocation9 + $0x18] sm:$0xff]
          %v287 = vld [vmem:[#allocation9 + $0x20] sm:$0xff]
          %v288 = vld [vmem:[#allocation9 + $0x28] sm:$0xff]
          %v289 = vld [vmem:[#allocation9 + $0x30] sm:$0xff]
          %v290 = vld [vmem:[#allocation9 + $0x38] sm:$0xff]
          %v295 = vunpack.c.l.b16 %v279
          %v296 = vunpack.c.l.b16 %v280
          %v297 = vunpack.c.l.b16 %v281
          %v298 = vunpack.c.l.b16 %v282
          %v299 = vpack.c.b16 %v296, %v295
          %v300 = vpack.c.b16 %v298, %v297
          %v309 = vunpack.c.l.b16 %v283
          %v310 = vunpack.c.h.b16 %v283
          %v311 = vunpack.c.l.b16 %v284
          %v312 = vunpack.c.h.b16 %v284
          %v313 = vunpack.c.l.b16 %v285
          %v314 = vunpack.c.h.b16 %v285
          %v315 = vunpack.c.l.b16 %v286
          %v316 = vunpack.c.h.b16 %v286
          %v317 = vunpack.c.l.b16 %v287
          %v318 = vunpack.c.h.b16 %v287
          %v319 = vunpack.c.l.b16 %v288
          %v320 = vunpack.c.h.b16 %v288
          %v321 = vunpack.c.l.b16 %v289
          %v322 = vunpack.c.h.b16 %v289
          %v323 = vunpack.c.l.b16 %v290
          %v324 = vunpack.c.h.b16 %v290
          %v325 = vpack.c.b16 %v311, %v309
          %v326 = vpack.c.b16 %v312, %v310
          %v327 = vpack.c.b16 %v315, %v313
          %v328 = vpack.c.b16 %v316, %v314
          %v329 = vpack.c.b16 %v319, %v317
          %v330 = vpack.c.b16 %v320, %v318
          %v331 = vpack.c.b16 %v323, %v321
          %v332 = vpack.c.b16 %v324, %v322
          %vm341 = vcmask 523264
          %v343 = vsel %vm341, %v299, 0
          %v346 = vsel %vm341, %v300, 0
          %348 = vmatprep.subr.bf16.mxu0 0
          %349 = vmatpush1.bf16.msra.mxu0 0
          %350 = vmatprep.subr.bf16.mxu0 0
          %351 = vmatpush1.bf16.msra.mxu0 0
          %352 = vmatprep.subr.bf16.mxu0 0
          %353 = vmatpush1.bf16.msra.mxu0 0
          %354 = vmatprep.subr.bf16.mxu0 0
          %355 = vmatpush1.bf16.msra.mxu0 0
          %356 = vmatprep.subr.bf16.mxu0 %v332
          %357 = vmatpush1.bf16.msra.mxu0 %v331
          %358 = vmatprep.subr.bf16.mxu0 %v330
          %359 = vmatpush1.bf16.msra.mxu0 %v329
          %360 = vmatprep.subr.bf16.mxu0 %v328
          %361 = vmatpush1.bf16.msra.mxu0 %v327
          %362 = vmatprep.subr.bf16.mxu0 %v326
          %363 = vmatpush1.bf16.msra.mxu0 %v325
          %364 = vmatprep.subr.bf16.mxu0 0
          %365 = vmatpush2.bf16.msra.mxu0 0
          %366 = vmatprep.subr.bf16.mxu0 0
          %367 = vmatpush2.bf16.msra.mxu0 0
          %368 = vmatprep.subr.bf16.mxu0 0
          %369 = vmatpush2.bf16.msra.mxu0 0
          %370 = vmatprep.subr.bf16.mxu0 0
          %371 = vmatpush2.bf16.msra.mxu0 0
          %372 = vmatprep.subr.bf16.mxu0 0
          %373 = vmatpush2.bf16.msra.mxu0 0
          %374 = vmatprep.subr.bf16.mxu0 0
          %375 = vmatpush2.bf16.msra.mxu0 0
          %376 = vmatprep.subr.bf16.mxu0 0
          %377 = vmatpush2.bf16.msra.mxu0 0
          %378 = vmatprep.subr.bf16.mxu0 0
          %379 = vmatpush2.bf16.msra.mxu0 0
          %380 = vmatprep.mubr.bf16.mxu0 0
          %381 = vmatmul.mubr.bf16.gmra.mxu0 %v343
          %v382 = vpop.f32.mrf.mxu0
          %v383 = vadd.f32 0.0, %v382
          %v384 = vpop.f32.mrf.mxu0
          %v385 = vadd.f32 0.0, %v384
          %v386 = vpop.f32.mrf.mxu0
          %v387 = vadd.f32 0.0, %v386
          %v388 = vpop.f32.mrf.mxu0
          %v389 = vadd.f32 0.0, %v388
          %390 = vmatprep.mubr.bf16.mxu0 0
          %391 = vmatmul.mubr.bf16.gmra.mxu0 %v346
          %v392 = vpop.f32.mrf.mxu0
          %v393 = vadd.f32 0.0, %v392
          %v394 = vpop.f32.mrf.mxu0
          %v395 = vadd.f32 0.0, %v394
          %v396 = vpop.f32.mrf.mxu0
          %v397 = vadd.f32 0.0, %v396
          %v398 = vpop.f32.mrf.mxu0
          %v399 = vadd.f32 0.0, %v398
          %400 = vdwg.mxu0
          %v401 = vpack.c.bf16 %v387, %v383
          %v402 = vpack.c.bf16 %v389, %v385
          %v403 = vpack.c.bf16 %v397, %v393
          %v404 = vpack.c.bf16 %v399, %v395
          %v407 = vunpack.c.l.b16 %v401
          %v408 = vunpack.c.h.b16 %v401
          %v409 = vunpack.c.l.b16 %v403
          %v410 = vunpack.c.h.b16 %v403
          %v411 = vpack.c.b16 %v407, %v407
          %v412 = vpack.c.b16 %v408, %v408
          %v413 = vpack.c.b16 %v409, %v409
          %v414 = vpack.c.b16 %v410, %v410
          %vm419 = vcmask 60416
          %420 = vst.msk [vmem:[#allocation2] sm:$0xf] %vm419, %v411
          %421 = vst.msk [vmem:[#allocation2 + $0x4] sm:$0xf] %vm419, %v412
          %422 = vst.msk [vmem:[#allocation2 + $0x8] sm:$0xf] %vm419, %v413
          %423 = vst.msk [vmem:[#allocation2 + $0xc] sm:$0xf] %vm419, %v414
          %424 = vrot.lane.b32.xlu0 %v401, 64
          %v425 = vpop.permute.xlu0 %424
          %426 = vrot.lane.b32.xlu0 %v403, 64
          %v427 = vpop.permute.xlu0 %426
          %430 = vxpose.xlu0.c.b16.start [1/8] %v425, 128
          %431 = vxpose.xlu0.c.b16.cont [2/8] %v427, 128
          %432 = vxpose.xlu0.c.b16.cont [3/8] 0, 128
          %433 = vxpose.xlu0.c.b16.cont [4/8] 0, 128
          %434 = vxpose.xlu0.c.b16.cont [5/8] 0, 128
          %435 = vxpose.xlu0.c.b16.cont [6/8] 0, 128
          %436 = vxpose.xlu0.c.b16.cont [7/8] 0, 128
          %437 = vxpose.xlu0.c.b16.end [8/8] 0, 128
          %v438 = vpop.trf.xlu0
          %v439 = vpop.trf.xlu0
          %v440 = vpop.trf.xlu0
          %v441 = vpop.trf.xlu0
          %v442 = vpop.trf.xlu0
          %v443 = vpop.trf.xlu0
          %v444 = vpop.trf.xlu0
          %v445 = vpop.trf.xlu0
          %vm446 = vcmask 257024
          %447 = vst.msk [vmem:[#allocation3] sm:$0xf] %vm446, %v438
          %v450 = vunpack.c.l.b16 %v402
          %v451 = vunpack.c.h.b16 %v402
          %v452 = vunpack.c.l.b16 %v404
          %v453 = vunpack.c.h.b16 %v404
          %v454 = vpack.c.b16 %v450, %v450
          %v455 = vpack.c.b16 %v451, %v451
          %v456 = vpack.c.b16 %v452, %v452
          %v457 = vpack.c.b16 %v453, %v453
          %462 = vst.msk [vmem:[#allocation4] sm:$0xf] %vm419, %v454
          %463 = vst.msk [vmem:[#allocation4 + $0x4] sm:$0xf] %vm419, %v455
          %464 = vst.msk [vmem:[#allocation4 + $0x8] sm:$0xf] %vm419, %v456
          %465 = vst.msk [vmem:[#allocation4 + $0xc] sm:$0xf] %vm419, %v457
          %466 = vrot.lane.b32.xlu0 %v411, 120
          %v467 = vpop.permute.xlu0 %466
          %468 = vrot.lane.b32.xlu0 %v412, 120
          %v469 = vpop.permute.xlu0 %468
          %470 = vrot.lane.b32.xlu0 %v413, 120
          %v471 = vpop.permute.xlu0 %470
          %472 = vrot.lane.b32.xlu0 %v414, 120
          %v473 = vpop.permute.xlu0 %472
          %s478 = scalar_lea.vmem [#allocation2], 16
          %479 = vst.msk [vmem:[%s478] sm:$0xf] %vm419, %v467
          %480 = vst.msk [vmem:[%s478 + $0x4] sm:$0xf] %vm419, %v469
          %481 = vst.msk [vmem:[%s478 + $0x8] sm:$0xf] %vm419, %v471
          %482 = vst.msk [vmem:[%s478 + $0xc] sm:$0xf] %vm419, %v473
          %483 = vrot.lane.b32.xlu0 %v401, 56
          %v484 = vpop.permute.xlu0 %483
          %485 = vrot.lane.b32.xlu0 %v403, 56
          %v486 = vpop.permute.xlu0 %485
          %489 = vxpose.xlu0.c.b16.start [1/8] %v484, 128
          %490 = vxpose.xlu0.c.b16.cont [2/8] %v486, 128
          %491 = vxpose.xlu0.c.b16.cont [3/8] 0, 128
          %492 = vxpose.xlu0.c.b16.cont [4/8] 0, 128
          %493 = vxpose.xlu0.c.b16.cont [5/8] 0, 128
          %494 = vxpose.xlu0.c.b16.cont [6/8] 0, 128
          %495 = vxpose.xlu0.c.b16.cont [7/8] 0, 128
          %496 = vxpose.xlu0.c.b16.end [8/8] 0, 128
          %v497 = vpop.trf.xlu0
          %v498 = vpop.trf.xlu0
          %v499 = vpop.trf.xlu0
          %v500 = vpop.trf.xlu0
          %v501 = vpop.trf.xlu0
          %v502 = vpop.trf.xlu0
          %v503 = vpop.trf.xlu0
          %v504 = vpop.trf.xlu0
          %s505 = scalar_lea.vmem [#allocation3], 4
          %506 = vst.msk [vmem:[%s505] sm:$0xf] %vm446, %v497
          %507 = vrot.lane.b32.xlu0 %v454, 120
          %v508 = vpop.permute.xlu0 %507
          %509 = vrot.lane.b32.xlu0 %v455, 120
          %v510 = vpop.permute.xlu0 %509
          %511 = vrot.lane.b32.xlu0 %v456, 120
          %v512 = vpop.permute.xlu0 %511
          %513 = vrot.lane.b32.xlu0 %v457, 120
          %v514 = vpop.permute.xlu0 %513
          %s519 = scalar_lea.vmem [#allocation4], 16
          %520 = vst.msk [vmem:[%s519] sm:$0xf] %vm419, %v508
          %521 = vst.msk [vmem:[%s519 + $0x4] sm:$0xf] %vm419, %v510
          %522 = vst.msk [vmem:[%s519 + $0x8] sm:$0xf] %vm419, %v512
          %523 = vst.msk [vmem:[%s519 + $0xc] sm:$0xf] %vm419, %v514
          %524 = vrot.lane.b32.xlu0 %v411, 112
          %v525 = vpop.permute.xlu0 %524
          %526 = vrot.lane.b32.xlu0 %v412, 112
          %v527 = vpop.permute.xlu0 %526
          %528 = vrot.lane.b32.xlu0 %v413, 112
          %v529 = vpop.permute.xlu0 %528
          %530 = vrot.lane.b32.xlu0 %v414, 112
          %v531 = vpop.permute.xlu0 %530
          %s536 = scalar_lea.vmem [#allocation2], 32
          %537 = vst.msk [vmem:[%s536] sm:$0xf] %vm419, %v525
          %538 = vst.msk [vmem:[%s536 + $0x4] sm:$0xf] %vm419, %v527
          %539 = vst.msk [vmem:[%s536 + $0x8] sm:$0xf] %vm419, %v529
          %540 = vst.msk [vmem:[%s536 + $0xc] sm:$0xf] %vm419, %v531
          %541 = vrot.lane.b32.xlu0 %v401, 48
          %v542 = vpop.permute.xlu0 %541
          %543 = vrot.lane.b32.xlu0 %v403, 48
          %v544 = vpop.permute.xlu0 %543
          %547 = vxpose.xlu0.c.b16.start [1/8] %v542, 128
          %548 = vxpose.xlu0.c.b16.cont [2/8] %v544, 128
          %549 = vxpose.xlu0.c.b16.cont [3/8] 0, 128
          %550 = vxpose.xlu0.c.b16.cont [4/8] 0, 128
          %551 = vxpose.xlu0.c.b16.cont [5/8] 0, 128
          %552 = vxpose.xlu0.c.b16.cont [6/8] 0, 128
          %553 = vxpose.xlu0.c.b16.cont [7/8] 0, 128
          %554 = vxpose.xlu0.c.b16.end [8/8] 0, 128
          %v555 = vpop.trf.xlu0
          %v556 = vpop.trf.xlu0
          %v557 = vpop.trf.xlu0
          %v558 = vpop.trf.xlu0
          %v559 = vpop.trf.xlu0
          %v560 = vpop.trf.xlu0
          %v561 = vpop.trf.xlu0
          %v562 = vpop.trf.xlu0
          %s563 = scalar_lea.vmem [#allocation3], 8
          %564 = vst.msk [vmem:[%s563] sm:$0xf] %vm446, %v555
          %565 = vrot.lane.b32.xlu0 %v454, 112
          %v566 = vpop.permute.xlu0 %565
          %567 = vrot.lane.b32.xlu0 %v455, 112
          %v568 = vpop.permute.xlu0 %567
          %569 = vrot.lane.b32.xlu0 %v456, 112
          %v570 = vpop.permute.xlu0 %569
          %571 = vrot.lane.b32.xlu0 %v457, 112
          %v572 = vpop.permute.xlu0 %571
          %s577 = scalar_lea.vmem [#allocation4], 32
          %578 = vst.msk [vmem:[%s577] sm:$0xf] %vm419, %v566
          %579 = vst.msk [vmem:[%s577 + $0x4] sm:$0xf] %vm419, %v568
          %580 = vst.msk [vmem:[%s577 + $0x8] sm:$0xf] %vm419, %v570
          %581 = vst.msk [vmem:[%s577 + $0xc] sm:$0xf] %vm419, %v572
          %582 = vrot.lane.b32.xlu0 %v411, 104
          %v583 = vpop.permute.xlu0 %582
          %584 = vrot.lane.b32.xlu0 %v412, 104
          %v585 = vpop.permute.xlu0 %584
          %586 = vrot.lane.b32.xlu0 %v413, 104
          %v587 = vpop.permute.xlu0 %586
          %588 = vrot.lane.b32.xlu0 %v414, 104
          %v589 = vpop.permute.xlu0 %588
          %s594 = scalar_lea.vmem [#allocation2], 48
          %595 = vst.msk [vmem:[%s594] sm:$0xf] %vm419, %v583
          %596 = vst.msk [vmem:[%s594 + $0x4] sm:$0xf] %vm419, %v585
          %597 = vst.msk [vmem:[%s594 + $0x8] sm:$0xf] %vm419, %v587
          %598 = vst.msk [vmem:[%s594 + $0xc] sm:$0xf] %vm419, %v589
          %599 = vrot.lane.b32.xlu0 %v401, 40
          %v600 = vpop.permute.xlu0 %599
          %601 = vrot.lane.b32.xlu0 %v403, 40
          %v602 = vpop.permute.xlu0 %601
          %605 = vxpose.xlu0.c.b16.start [1/8] %v600, 128
          %606 = vxpose.xlu0.c.b16.cont [2/8] %v602, 128
          %607 = vxpose.xlu0.c.b16.cont [3/8] 0, 128
          %608 = vxpose.xlu0.c.b16.cont [4/8] 0, 128
          %609 = vxpose.xlu0.c.b16.cont [5/8] 0, 128
          %610 = vxpose.xlu0.c.b16.cont [6/8] 0, 128
          %611 = vxpose.xlu0.c.b16.cont [7/8] 0, 128
          %612 = vxpose.xlu0.c.b16.end [8/8] 0, 128
          %v613 = vpop.trf.xlu0
          %v614 = vpop.trf.xlu0
          %v615 = vpop.trf.xlu0
          %v616 = vpop.trf.xlu0
          %v617 = vpop.trf.xlu0
          %v618 = vpop.trf.xlu0
          %v619 = vpop.trf.xlu0
          %v620 = vpop.trf.xlu0
          %s621 = scalar_lea.vmem [#allocation3], 12
          %622 = vst.msk [vmem:[%s621] sm:$0xf] %vm446, %v613
          %623 = vrot.lane.b32.xlu0 %v454, 104
          %v624 = vpop.permute.xlu0 %623
          %625 = vrot.lane.b32.xlu0 %v455, 104
          %v626 = vpop.permute.xlu0 %625
          %627 = vrot.lane.b32.xlu0 %v456, 104
          %v628 = vpop.permute.xlu0 %627
          %629 = vrot.lane.b32.xlu0 %v457, 104
          %v630 = vpop.permute.xlu0 %629
          %s635 = scalar_lea.vmem [#allocation4], 48
          %636 = vst.msk [vmem:[%s635] sm:$0xf] %vm419, %v624
          %637 = vst.msk [vmem:[%s635 + $0x4] sm:$0xf] %vm419, %v626
          %638 = vst.msk [vmem:[%s635 + $0x8] sm:$0xf] %vm419, %v628
          %639 = vst.msk [vmem:[%s635 + $0xc] sm:$0xf] %vm419, %v630
          %640 = vrot.lane.b32.xlu0 %v411, 96
          %v641 = vpop.permute.xlu0 %640
          %642 = vrot.lane.b32.xlu0 %v412, 96
          %v643 = vpop.permute.xlu0 %642
          %644 = vrot.lane.b32.xlu0 %v413, 96
          %v645 = vpop.permute.xlu0 %644
          %646 = vrot.lane.b32.xlu0 %v414, 96
          %v647 = vpop.permute.xlu0 %646
          %s652 = scalar_lea.vmem [#allocation2], 64
          %653 = vst.msk [vmem:[%s652] sm:$0xf] %vm419, %v641
          %654 = vst.msk [vmem:[%s652 + $0x4] sm:$0xf] %vm419, %v643
          %655 = vst.msk [vmem:[%s652 + $0x8] sm:$0xf] %vm419, %v645
          %656 = vst.msk [vmem:[%s652 + $0xc] sm:$0xf] %vm419, %v647
          %657 = vrot.lane.b32.xlu0 %v401, 32
          %v658 = vpop.permute.xlu0 %657
          %659 = vrot.lane.b32.xlu0 %v403, 32
          %v660 = vpop.permute.xlu0 %659
          %663 = vxpose.xlu0.c.b16.start [1/8] %v658, 128
          %664 = vxpose.xlu0.c.b16.cont [2/8] %v660, 128
          %665 = vxpose.xlu0.c.b16.cont [3/8] 0, 128
          %666 = vxpose.xlu0.c.b16.cont [4/8] 0, 128
          %667 = vxpose.xlu0.c.b16.cont [5/8] 0, 128
          %668 = vxpose.xlu0.c.b16.cont [6/8] 0, 128
          %669 = vxpose.xlu0.c.b16.cont [7/8] 0, 128
          %670 = vxpose.xlu0.c.b16.end [8/8] 0, 128
          %v671 = vpop.trf.xlu0
          %v672 = vpop.trf.xlu0
          %v673 = vpop.trf.xlu0
          %v674 = vpop.trf.xlu0
          %v675 = vpop.trf.xlu0
          %v676 = vpop.trf.xlu0
          %v677 = vpop.trf.xlu0
          %v678 = vpop.trf.xlu0
          %s679 = scalar_lea.vmem [#allocation3], 16
          %680 = vst.msk [vmem:[%s679] sm:$0xf] %vm446, %v671
          %681 = vrot.lane.b32.xlu0 %v454, 96
          %v682 = vpop.permute.xlu0 %681
          %683 = vrot.lane.b32.xlu0 %v455, 96
          %v684 = vpop.permute.xlu0 %683
          %685 = vrot.lane.b32.xlu0 %v456, 96
          %v686 = vpop.permute.xlu0 %685
          %687 = vrot.lane.b32.xlu0 %v457, 96
          %v688 = vpop.permute.xlu0 %687
          %s693 = scalar_lea.vmem [#allocation4], 64
          %694 = vst.msk [vmem:[%s693] sm:$0xf] %vm419, %v682
          %695 = vst.msk [vmem:[%s693 + $0x4] sm:$0xf] %vm419, %v684
          %696 = vst.msk [vmem:[%s693 + $0x8] sm:$0xf] %vm419, %v686
          %697 = vst.msk [vmem:[%s693 + $0xc] sm:$0xf] %vm419, %v688
          %698 = vrot.lane.b32.xlu0 %v411, 88
          %v699 = vpop.permute.xlu0 %698
          %700 = vrot.lane.b32.xlu0 %v412, 88
          %v701 = vpop.permute.xlu0 %700
          %702 = vrot.lane.b32.xlu0 %v413, 88
          %v703 = vpop.permute.xlu0 %702
          %704 = vrot.lane.b32.xlu0 %v414, 88
          %v705 = vpop.permute.xlu0 %704
          %s710 = scalar_lea.vmem [#allocation2], 80
          %711 = vst.msk [vmem:[%s710] sm:$0xf] %vm419, %v699
          %712 = vst.msk [vmem:[%s710 + $0x4] sm:$0xf] %vm419, %v701
          %713 = vst.msk [vmem:[%s710 + $0x8] sm:$0xf] %vm419, %v703
          %714 = vst.msk [vmem:[%s710 + $0xc] sm:$0xf] %vm419, %v705
          %715 = vrot.lane.b32.xlu0 %v401, 24
          %v716 = vpop.permute.xlu0 %715
          %717 = vrot.lane.b32.xlu0 %v403, 24
          %v718 = vpop.permute.xlu0 %717
          %721 = vxpose.xlu0.c.b16.start [1/8] %v716, 128
          %722 = vxpose.xlu0.c.b16.cont [2/8] %v718, 128
          %723 = vxpose.xlu0.c.b16.cont [3/8] 0, 128
          %724 = vxpose.xlu0.c.b16.cont [4/8] 0, 128
          %725 = vxpose.xlu0.c.b16.cont [5/8] 0, 128
          %726 = vxpose.xlu0.c.b16.cont [6/8] 0, 128
          %727 = vxpose.xlu0.c.b16.cont [7/8] 0, 128
          %728 = vxpose.xlu0.c.b16.end [8/8] 0, 128
          %v729 = vpop.trf.xlu0
          %v730 = vpop.trf.xlu0
          %v731 = vpop.trf.xlu0
          %v732 = vpop.trf.xlu0
          %v733 = vpop.trf.xlu0
          %v734 = vpop.trf.xlu0
          %v735 = vpop.trf.xlu0
          %v736 = vpop.trf.xlu0
          %s737 = scalar_lea.vmem [#allocation3], 20
          %738 = vst.msk [vmem:[%s737] sm:$0xf] %vm446, %v729
          %739 = vrot.lane.b32.xlu0 %v454, 88
          %v740 = vpop.permute.xlu0 %739
          %741 = vrot.lane.b32.xlu0 %v455, 88
          %v742 = vpop.permute.xlu0 %741
          %743 = vrot.lane.b32.xlu0 %v456, 88
          %v744 = vpop.permute.xlu0 %743
          %745 = vrot.lane.b32.xlu0 %v457, 88
          %v746 = vpop.permute.xlu0 %745
          %s751 = scalar_lea.vmem [#allocation4], 80
          %752 = vst.msk [vmem:[%s751] sm:$0xf] %vm419, %v740
          %753 = vst.msk [vmem:[%s751 + $0x4] sm:$0xf] %vm419, %v742
          %754 = vst.msk [vmem:[%s751 + $0x8] sm:$0xf] %vm419, %v744
          %755 = vst.msk [vmem:[%s751 + $0xc] sm:$0xf] %vm419, %v746
          %756 = vrot.lane.b32.xlu0 %v411, 80
          %v757 = vpop.permute.xlu0 %756
          %758 = vrot.lane.b32.xlu0 %v412, 80
          %v759 = vpop.permute.xlu0 %758
          %760 = vrot.lane.b32.xlu0 %v413, 80
          %v761 = vpop.permute.xlu0 %760
          %762 = vrot.lane.b32.xlu0 %v414, 80
          %v763 = vpop.permute.xlu0 %762
          %s768 = scalar_lea.vmem [#allocation2], 96
          %769 = vst.msk [vmem:[%s768] sm:$0xf] %vm419, %v757
          %770 = vst.msk [vmem:[%s768 + $0x4] sm:$0xf] %vm419, %v759
          %771 = vst.msk [vmem:[%s768 + $0x8] sm:$0xf] %vm419, %v761
          %772 = vst.msk [vmem:[%s768 + $0xc] sm:$0xf] %vm419, %v763
          %773 = vrot.lane.b32.xlu0 %v401, 16
          %v774 = vpop.permute.xlu0 %773
          %775 = vrot.lane.b32.xlu0 %v403, 16
          %v776 = vpop.permute.xlu0 %775
          %779 = vxpose.xlu0.c.b16.start [1/8] %v774, 128
          %780 = vxpose.xlu0.c.b16.cont [2/8] %v776, 128
          %781 = vxpose.xlu0.c.b16.cont [3/8] 0, 128
          %782 = vxpose.xlu0.c.b16.cont [4/8] 0, 128
          %783 = vxpose.xlu0.c.b16.cont [5/8] 0, 128
          %784 = vxpose.xlu0.c.b16.cont [6/8] 0, 128
          %785 = vxpose.xlu0.c.b16.cont [7/8] 0, 128
          %786 = vxpose.xlu0.c.b16.end [8/8] 0, 128
          %v787 = vpop.trf.xlu0
          %v788 = vpop.trf.xlu0
          %v789 = vpop.trf.xlu0
          %v790 = vpop.trf.xlu0
          %v791 = vpop.trf.xlu0
          %v792 = vpop.trf.xlu0
          %v793 = vpop.trf.xlu0
          %v794 = vpop.trf.xlu0
          %s795 = scalar_lea.vmem [#allocation3], 24
          %796 = vst.msk [vmem:[%s795] sm:$0xf] %vm446, %v787
          %797 = vrot.lane.b32.xlu0 %v454, 80
          %v798 = vpop.permute.xlu0 %797
          %799 = vrot.lane.b32.xlu0 %v455, 80
          %v800 = vpop.permute.xlu0 %799
          %801 = vrot.lane.b32.xlu0 %v456, 80
          %v802 = vpop.permute.xlu0 %801
          %803 = vrot.lane.b32.xlu0 %v457, 80
          %v804 = vpop.permute.xlu0 %803
          %s809 = scalar_lea.vmem [#allocation4], 96
          %810 = vst.msk [vmem:[%s809] sm:$0xf] %vm419, %v798
          %811 = vst.msk [vmem:[%s809 + $0x4] sm:$0xf] %vm419, %v800
          %812 = vst.msk [vmem:[%s809 + $0x8] sm:$0xf] %vm419, %v802
          %813 = vst.msk [vmem:[%s809 + $0xc] sm:$0xf] %vm419, %v804
          %814 = vrot.lane.b32.xlu0 %v411, 72
          %v815 = vpop.permute.xlu0 %814
          %816 = vrot.lane.b32.xlu0 %v412, 72
          %v817 = vpop.permute.xlu0 %816
          %818 = vrot.lane.b32.xlu0 %v413, 72
          %v819 = vpop.permute.xlu0 %818
          %820 = vrot.lane.b32.xlu0 %v414, 72
          %v821 = vpop.permute.xlu0 %820
          %s826 = scalar_lea.vmem [#allocation2], 112
          %827 = vst.msk [vmem:[%s826] sm:$0xf] %vm419, %v815
          %828 = vst.msk [vmem:[%s826 + $0x4] sm:$0xf] %vm419, %v817
          %829 = vst.msk [vmem:[%s826 + $0x8] sm:$0xf] %vm419, %v819
          %830 = vst.msk [vmem:[%s826 + $0xc] sm:$0xf] %vm419, %v821
          %831 = vrot.lane.b32.xlu0 %v401, 8
          %v832 = vpop.permute.xlu0 %831
          %833 = vrot.lane.b32.xlu0 %v403, 8
          %v834 = vpop.permute.xlu0 %833
          %837 = vxpose.xlu0.c.b16.start [1/8] %v832, 128
          %838 = vxpose.xlu0.c.b16.cont [2/8] %v834, 128
          %839 = vxpose.xlu0.c.b16.cont [3/8] 0, 128
          %840 = vxpose.xlu0.c.b16.cont [4/8] 0, 128
          %841 = vxpose.xlu0.c.b16.cont [5/8] 0, 128
          %842 = vxpose.xlu0.c.b16.cont [6/8] 0, 128
          %843 = vxpose.xlu0.c.b16.cont [7/8] 0, 128
          %844 = vxpose.xlu0.c.b16.end [8/8] 0, 128
          %v845 = vpop.trf.xlu0
          %v846 = vpop.trf.xlu0
          %v847 = vpop.trf.xlu0
          %v848 = vpop.trf.xlu0
          %v849 = vpop.trf.xlu0
          %v850 = vpop.trf.xlu0
          %v851 = vpop.trf.xlu0
          %v852 = vpop.trf.xlu0
          %s853 = scalar_lea.vmem [#allocation3], 28
          %854 = vst.msk [vmem:[%s853] sm:$0xf] %vm446, %v845
          %855 = vrot.lane.b32.xlu0 %v454, 72
          %v856 = vpop.permute.xlu0 %855
          %857 = vrot.lane.b32.xlu0 %v455, 72
          %v858 = vpop.permute.xlu0 %857
          %859 = vrot.lane.b32.xlu0 %v456, 72
          %v860 = vpop.permute.xlu0 %859
          %861 = vrot.lane.b32.xlu0 %v457, 72
          %v862 = vpop.permute.xlu0 %861
          %s867 = scalar_lea.vmem [#allocation4], 112
          %868 = vst.msk [vmem:[%s867] sm:$0xf] %vm419, %v856
          %869 = vst.msk [vmem:[%s867 + $0x4] sm:$0xf] %vm419, %v858
          %870 = vst.msk [vmem:[%s867 + $0x8] sm:$0xf] %vm419, %v860
          %871 = vst.msk [vmem:[%s867 + $0xc] sm:$0xf] %vm419, %v862
        $region48: #{tpu_custom_call.1} parent=31 // pred_fallthru
          _
        %s872 = smul.u32 %s31, 16
        %s873 = sshra.s32 %s872, 3
        %s874 = sand.u32 %s872, 7
        %s875 = smul.addr %s873, 4
        %s876 = scalar_lea.vmem [#allocation2], %s875
        %v877 = vld [vmem:[%s876] sm:$0xf]
        %v878 = vld [vmem:[%s876 + $0x4] sm:$0xf]
        %v879 = vld [vmem:[%s876 + $0x10] sm:$0xf]
        %v880 = vld [vmem:[%s876 + $0x14] sm:$0xf]
        %v881 = vld [vmem:[%s876 + $0x20] sm:$0xf]
        %v882 = vld [vmem:[%s876 + $0x24] sm:$0xf]
        %v883 = vld [vmem:[%s876 + $0x30] sm:$0xf]
        %v884 = vld [vmem:[%s876 + $0x34] sm:$0xf]
        %v885 = vld [vmem:[%s876 + $0x40] sm:$0xf]
        %v886 = vld [vmem:[%s876 + $0x44] sm:$0xf]
        %v887 = vld [vmem:[%s876 + $0x50] sm:$0xf]
        %v888 = vld [vmem:[%s876 + $0x54] sm:$0xf]
        %v889 = vld [vmem:[%s876 + $0x60] sm:$0xf]
        %v890 = vld [vmem:[%s876 + $0x64] sm:$0xf]
        %v891 = vld [vmem:[%s876 + $0x70] sm:$0xf]
        %v892 = vld [vmem:[%s876 + $0x74] sm:$0xf]
        %v893 = vld [vmem:[#allocation3] sm:$0xf]
        %v894 = vld [vmem:[#allocation3 + $0x4] sm:$0xf]
        %v895 = vld [vmem:[#allocation3 + $0x8] sm:$0xf]
        %v896 = vld [vmem:[#allocation3 + $0xc] sm:$0xf]
        %v897 = vld [vmem:[#allocation3 + $0x10] sm:$0xf]
        %v898 = vld [vmem:[#allocation3 + $0x14] sm:$0xf]
        %v899 = vld [vmem:[#allocation3 + $0x18] sm:$0xf]
        %v900 = vld [vmem:[#allocation3 + $0x1c] sm:$0xf]
        %v903 = vunpack.c.l.b16 %v877
        %v904 = vunpack.c.l.b16 %v878
        %v905 = vpack.c.b16 %v904, %v903
        %vm906 = vcmask 64512
        %v908 = vsel %vm906, %v905, 0
        %vm910 = vcmask 1043456
        %v912 = vsel %vm910, %v893, 0
        %914 = vmatprep.subr.bf16.mxu0 0
        %915 = vmatpush1.bf16.msra.mxu0 0
        %916 = vmatprep.subr.bf16.mxu0 0
        %917 = vmatpush1.bf16.msra.mxu0 0
        %918 = vmatprep.subr.bf16.mxu0 0
        %919 = vmatpush1.bf16.msra.mxu0 0
        %920 = vmatprep.subr.bf16.mxu0 0
        %921 = vmatpush1.bf16.msra.mxu0 0
        %922 = vmatprep.subr.bf16.mxu0 0
        %923 = vmatpush1.bf16.msra.mxu0 0
        %924 = vmatprep.subr.bf16.mxu0 0
        %925 = vmatpush1.bf16.msra.mxu0 0
        %926 = vmatprep.subr.bf16.mxu0 0
        %927 = vmatpush1.bf16.msra.mxu0 0
        %928 = vmatprep.subr.bf16.mxu0 0
        %929 = vmatpush1.bf16.msra.mxu0 %v912
        %930 = vmatprep.subr.bf16.mxu0 0
        %931 = vmatpush2.bf16.msra.mxu0 0
        %932 = vmatprep.subr.bf16.mxu0 0
        %933 = vmatpush2.bf16.msra.mxu0 0
        %934 = vmatprep.subr.bf16.mxu0 0
        %935 = vmatpush2.bf16.msra.mxu0 0
        %936 = vmatprep.subr.bf16.mxu0 0
        %937 = vmatpush2.bf16.msra.mxu0 0
        %938 = vmatprep.subr.bf16.mxu0 0
        %939 = vmatpush2.bf16.msra.mxu0 0
        %940 = vmatprep.subr.bf16.mxu0 0
        %941 = vmatpush2.bf16.msra.mxu0 0
        %942 = vmatprep.subr.bf16.mxu0 0
        %943 = vmatpush2.bf16.msra.mxu0 0
        %944 = vmatprep.subr.bf16.mxu0 0
        %945 = vmatpush2.bf16.msra.mxu0 0
        %946 = vmatprep.mubr.bf16.mxu0 0
        %947 = vmatmul.mubr.bf16.gmra.mxu0 %v908
        %v948 = vpop.f32.mrf.mxu0
        %v949 = vadd.f32 0.0, %v948
        %v950 = vpop.f32.mrf.mxu0
        %v951 = vpop.f32.mrf.mxu0
        %v952 = vadd.f32 0.0, %v951
        %v953 = vpop.f32.mrf.mxu0
        %954 = vdwg.mxu0
        %v957 = vunpack.c.l.b16 %v879
        %v958 = vunpack.c.l.b16 %v880
        %v959 = vpack.c.b16 %v958, %v957
        %v961 = vsel %vm906, %v959, 0
        %v964 = vsel %vm910, %v894, 0
        %966 = vmatprep.subr.bf16.mxu0 0
        %967 = vmatpush1.bf16.msra.mxu0 0
        %968 = vmatprep.subr.bf16.mxu0 0
        %969 = vmatpush1.bf16.msra.mxu0 0
        %970 = vmatprep.subr.bf16.mxu0 0
        %971 = vmatpush1.bf16.msra.mxu0 0
        %972 = vmatprep.subr.bf16.mxu0 0
        %973 = vmatpush1.bf16.msra.mxu0 0
        %974 = vmatprep.subr.bf16.mxu0 0
        %975 = vmatpush1.bf16.msra.mxu0 0
        %976 = vmatprep.subr.bf16.mxu0 0
        %977 = vmatpush1.bf16.msra.mxu0 0
        %978 = vmatprep.subr.bf16.mxu0 0
        %979 = vmatpush1.bf16.msra.mxu0 0
        %980 = vmatprep.subr.bf16.mxu0 0
        %981 = vmatpush1.bf16.msra.mxu0 %v964
        %982 = vmatprep.subr.bf16.mxu0 0
        %983 = vmatpush2.bf16.msra.mxu0 0
        %984 = vmatprep.subr.bf16.mxu0 0
        %985 = vmatpush2.bf16.msra.mxu0 0
        %986 = vmatprep.subr.bf16.mxu0 0
        %987 = vmatpush2.bf16.msra.mxu0 0
        %988 = vmatprep.subr.bf16.mxu0 0
        %989 = vmatpush2.bf16.msra.mxu0 0
        %990 = vmatprep.subr.bf16.mxu0 0
        %991 = vmatpush2.bf16.msra.mxu0 0
        %992 = vmatprep.subr.bf16.mxu0 0
        %993 = vmatpush2.bf16.msra.mxu0 0
        %994 = vmatprep.subr.bf16.mxu0 0
        %995 = vmatpush2.bf16.msra.mxu0 0
        %996 = vmatprep.subr.bf16.mxu0 0
        %997 = vmatpush2.bf16.msra.mxu0 0
        %998 = vmatprep.mubr.bf16.mxu0 0
        %999 = vmatmul.mubr.bf16.gmra.mxu0 %v961
        %v1000 = vpop.f32.mrf.mxu0
        %v1001 = vadd.f32 0.0, %v1000
        %v1002 = vpop.f32.mrf.mxu0
        %v1003 = vpop.f32.mrf.mxu0
        %v1004 = vadd.f32 0.0, %v1003
        %v1005 = vpop.f32.mrf.mxu0
        %1006 = vdwg.mxu0
        %v1009 = vunpack.c.l.b16 %v881
        %v1010 = vunpack.c.l.b16 %v882
        %v1011 = vpack.c.b16 %v1010, %v1009
        %v1013 = vsel %vm906, %v1011, 0
        %v1016 = vsel %vm910, %v895, 0
        %1018 = vmatprep.subr.bf16.mxu0 0
        %1019 = vmatpush1.bf16.msra.mxu0 0
        %1020 = vmatprep.subr.bf16.mxu0 0
        %1021 = vmatpush1.bf16.msra.mxu0 0
        %1022 = vmatprep.subr.bf16.mxu0 0
        %1023 = vmatpush1.bf16.msra.mxu0 0
        %1024 = vmatprep.subr.bf16.mxu0 0
        %1025 = vmatpush1.bf16.msra.mxu0 0
        %1026 = vmatprep.subr.bf16.mxu0 0
        %1027 = vmatpush1.bf16.msra.mxu0 0
        %1028 = vmatprep.subr.bf16.mxu0 0
        %1029 = vmatpush1.bf16.msra.mxu0 0
        %1030 = vmatprep.subr.bf16.mxu0 0
        %1031 = vmatpush1.bf16.msra.mxu0 0
        %1032 = vmatprep.subr.bf16.mxu0 0
        %1033 = vmatpush1.bf16.msra.mxu0 %v1016
        %1034 = vmatprep.subr.bf16.mxu0 0
        %1035 = vmatpush2.bf16.msra.mxu0 0
        %1036 = vmatprep.subr.bf16.mxu0 0
        %1037 = vmatpush2.bf16.msra.mxu0 0
        %1038 = vmatprep.subr.bf16.mxu0 0
        %1039 = vmatpush2.bf16.msra.mxu0 0
        %1040 = vmatprep.subr.bf16.mxu0 0
        %1041 = vmatpush2.bf16.msra.mxu0 0
        %1042 = vmatprep.subr.bf16.mxu0 0
        %1043 = vmatpush2.bf16.msra.mxu0 0
        %1044 = vmatprep.subr.bf16.mxu0 0
        %1045 = vmatpush2.bf16.msra.mxu0 0
        %1046 = vmatprep.subr.bf16.mxu0 0
        %1047 = vmatpush2.bf16.msra.mxu0 0
        %1048 = vmatprep.subr.bf16.mxu0 0
        %1049 = vmatpush2.bf16.msra.mxu0 0
        %1050 = vmatprep.mubr.bf16.mxu0 0
        %1051 = vmatmul.mubr.bf16.gmra.mxu0 %v1013
        %v1052 = vpop.f32.mrf.mxu0
        %v1053 = vadd.f32 0.0, %v1052
        %v1054 = vpop.f32.mrf.mxu0
        %v1055 = vpop.f32.mrf.mxu0
        %v1056 = vadd.f32 0.0, %v1055
        %v1057 = vpop.f32.mrf.mxu0
        %1058 = vdwg.mxu0
        %v1061 = vunpack.c.l.b16 %v883
        %v1062 = vunpack.c.l.b16 %v884
        %v1063 = vpack.c.b16 %v1062, %v1061
        %v1065 = vsel %vm906, %v1063, 0
        %v1068 = vsel %vm910, %v896, 0
        %1070 = vmatprep.subr.bf16.mxu0 0
        %1071 = vmatpush1.bf16.msra.mxu0 0
        %1072 = vmatprep.subr.bf16.mxu0 0
        %1073 = vmatpush1.bf16.msra.mxu0 0
        %1074 = vmatprep.subr.bf16.mxu0 0
        %1075 = vmatpush1.bf16.msra.mxu0 0
        %1076 = vmatprep.subr.bf16.mxu0 0
        %1077 = vmatpush1.bf16.msra.mxu0 0
        %1078 = vmatprep.subr.bf16.mxu0 0
        %1079 = vmatpush1.bf16.msra.mxu0 0
        %1080 = vmatprep.subr.bf16.mxu0 0
        %1081 = vmatpush1.bf16.msra.mxu0 0
        %1082 = vmatprep.subr.bf16.mxu0 0
        %1083 = vmatpush1.bf16.msra.mxu0 0
        %1084 = vmatprep.subr.bf16.mxu0 0
        %1085 = vmatpush1.bf16.msra.mxu0 %v1068
        %1086 = vmatprep.subr.bf16.mxu0 0
        %1087 = vmatpush2.bf16.msra.mxu0 0
        %1088 = vmatprep.subr.bf16.mxu0 0
        %1089 = vmatpush2.bf16.msra.mxu0 0
        %1090 = vmatprep.subr.bf16.mxu0 0
        %1091 = vmatpush2.bf16.msra.mxu0 0
        %1092 = vmatprep.subr.bf16.mxu0 0
        %1093 = vmatpush2.bf16.msra.mxu0 0
        %1094 = vmatprep.subr.bf16.mxu0 0
        %1095 = vmatpush2.bf16.msra.mxu0 0
        %1096 = vmatprep.subr.bf16.mxu0 0
        %1097 = vmatpush2.bf16.msra.mxu0 0
        %1098 = vmatprep.subr.bf16.mxu0 0
        %1099 = vmatpush2.bf16.msra.mxu0 0
        %1100 = vmatprep.subr.bf16.mxu0 0
        %1101 = vmatpush2.bf16.msra.mxu0 0
        %1102 = vmatprep.mubr.bf16.mxu0 0
        %1103 = vmatmul.mubr.bf16.gmra.mxu0 %v1065
        %v1104 = vpop.f32.mrf.mxu0
        %v1105 = vadd.f32 0.0, %v1104
        %v1106 = vpop.f32.mrf.mxu0
        %v1107 = vpop.f32.mrf.mxu0
        %v1108 = vadd.f32 0.0, %v1107
        %v1109 = vpop.f32.mrf.mxu0
        %1110 = vdwg.mxu0
        %v1113 = vunpack.c.l.b16 %v885
        %v1114 = vunpack.c.l.b16 %v886
        %v1115 = vpack.c.b16 %v1114, %v1113
        %v1117 = vsel %vm906, %v1115, 0
        %v1120 = vsel %vm910, %v897, 0
        %1122 = vmatprep.subr.bf16.mxu0 0
        %1123 = vmatpush1.bf16.msra.mxu0 0
        %1124 = vmatprep.subr.bf16.mxu0 0
        %1125 = vmatpush1.bf16.msra.mxu0 0
        %1126 = vmatprep.subr.bf16.mxu0 0
        %1127 = vmatpush1.bf16.msra.mxu0 0
        %1128 = vmatprep.subr.bf16.mxu0 0
        %1129 = vmatpush1.bf16.msra.mxu0 0
        %1130 = vmatprep.subr.bf16.mxu0 0
        %1131 = vmatpush1.bf16.msra.mxu0 0
        %1132 = vmatprep.subr.bf16.mxu0 0
        %1133 = vmatpush1.bf16.msra.mxu0 0
        %1134 = vmatprep.subr.bf16.mxu0 0
        %1135 = vmatpush1.bf16.msra.mxu0 0
        %1136 = vmatprep.subr.bf16.mxu0 0
        %1137 = vmatpush1.bf16.msra.mxu0 %v1120
        %1138 = vmatprep.subr.bf16.mxu0 0
        %1139 = vmatpush2.bf16.msra.mxu0 0
        %1140 = vmatprep.subr.bf16.mxu0 0
        %1141 = vmatpush2.bf16.msra.mxu0 0
        %1142 = vmatprep.subr.bf16.mxu0 0
        %1143 = vmatpush2.bf16.msra.mxu0 0
        %1144 = vmatprep.subr.bf16.mxu0 0
        %1145 = vmatpush2.bf16.msra.mxu0 0
        %1146 = vmatprep.subr.bf16.mxu0 0
        %1147 = vmatpush2.bf16.msra.mxu0 0
        %1148 = vmatprep.subr.bf16.mxu0 0
        %1149 = vmatpush2.bf16.msra.mxu0 0
        %1150 = vmatprep.subr.bf16.mxu0 0
        %1151 = vmatpush2.bf16.msra.mxu0 0
        %1152 = vmatprep.subr.bf16.mxu0 0
        %1153 = vmatpush2.bf16.msra.mxu0 0
        %1154 = vmatprep.mubr.bf16.mxu0 0
        %1155 = vmatmul.mubr.bf16.gmra.mxu0 %v1117
        %v1156 = vpop.f32.mrf.mxu0
        %v1157 = vadd.f32 0.0, %v1156
        %v1158 = vpop.f32.mrf.mxu0
        %v1159 = vpop.f32.mrf.mxu0
        %v1160 = vadd.f32 0.0, %v1159
        %v1161 = vpop.f32.mrf.mxu0
        %1162 = vdwg.mxu0
        %v1165 = vunpack.c.l.b16 %v887
        %v1166 = vunpack.c.l.b16 %v888
        %v1167 = vpack.c.b16 %v1166, %v1165
        %v1169 = vsel %vm906, %v1167, 0
        %v1172 = vsel %vm910, %v898, 0
        %1174 = vmatprep.subr.bf16.mxu0 0
        %1175 = vmatpush1.bf16.msra.mxu0 0
        %1176 = vmatprep.subr.bf16.mxu0 0
        %1177 = vmatpush1.bf16.msra.mxu0 0
        %1178 = vmatprep.subr.bf16.mxu0 0
        %1179 = vmatpush1.bf16.msra.mxu0 0
        %1180 = vmatprep.subr.bf16.mxu0 0
        %1181 = vmatpush1.bf16.msra.mxu0 0
        %1182 = vmatprep.subr.bf16.mxu0 0
        %1183 = vmatpush1.bf16.msra.mxu0 0
        %1184 = vmatprep.subr.bf16.mxu0 0
        %1185 = vmatpush1.bf16.msra.mxu0 0
        %1186 = vmatprep.subr.bf16.mxu0 0
        %1187 = vmatpush1.bf16.msra.mxu0 0
        %1188 = vmatprep.subr.bf16.mxu0 0
        %1189 = vmatpush1.bf16.msra.mxu0 %v1172
        %1190 = vmatprep.subr.bf16.mxu0 0
        %1191 = vmatpush2.bf16.msra.mxu0 0
        %1192 = vmatprep.subr.bf16.mxu0 0
        %1193 = vmatpush2.bf16.msra.mxu0 0
        %1194 = vmatprep.subr.bf16.mxu0 0
        %1195 = vmatpush2.bf16.msra.mxu0 0
        %1196 = vmatprep.subr.bf16.mxu0 0
        %1197 = vmatpush2.bf16.msra.mxu0 0
        %1198 = vmatprep.subr.bf16.mxu0 0
        %1199 = vmatpush2.bf16.msra.mxu0 0
        %1200 = vmatprep.subr.bf16.mxu0 0
        %1201 = vmatpush2.bf16.msra.mxu0 0
        %1202 = vmatprep.subr.bf16.mxu0 0
        %1203 = vmatpush2.bf16.msra.mxu0 0
        %1204 = vmatprep.subr.bf16.mxu0 0
        %1205 = vmatpush2.bf16.msra.mxu0 0
        %1206 = vmatprep.mubr.bf16.mxu0 0
        %1207 = vmatmul.mubr.bf16.gmra.mxu0 %v1169
        %v1208 = vpop.f32.mrf.mxu0
        %v1209 = vadd.f32 0.0, %v1208
        %v1210 = vpop.f32.mrf.mxu0
        %v1211 = vpop.f32.mrf.mxu0
        %v1212 = vadd.f32 0.0, %v1211
        %v1213 = vpop.f32.mrf.mxu0
        %1214 = vdwg.mxu0
        %v1217 = vunpack.c.l.b16 %v889
        %v1218 = vunpack.c.l.b16 %v890
        %v1219 = vpack.c.b16 %v1218, %v1217
        %v1221 = vsel %vm906, %v1219, 0
        %v1224 = vsel %vm910, %v899, 0
        %1226 = vmatprep.subr.bf16.mxu0 0
        %1227 = vmatpush1.bf16.msra.mxu0 0
        %1228 = vmatprep.subr.bf16.mxu0 0
        %1229 = vmatpush1.bf16.msra.mxu0 0
        %1230 = vmatprep.subr.bf16.mxu0 0
        %1231 = vmatpush1.bf16.msra.mxu0 0
        %1232 = vmatprep.subr.bf16.mxu0 0
        %1233 = vmatpush1.bf16.msra.mxu0 0
        %1234 = vmatprep.subr.bf16.mxu0 0
        %1235 = vmatpush1.bf16.msra.mxu0 0
        %1236 = vmatprep.subr.bf16.mxu0 0
        %1237 = vmatpush1.bf16.msra.mxu0 0
        %1238 = vmatprep.subr.bf16.mxu0 0
        %1239 = vmatpush1.bf16.msra.mxu0 0
        %1240 = vmatprep.subr.bf16.mxu0 0
        %1241 = vmatpush1.bf16.msra.mxu0 %v1224
        %1242 = vmatprep.subr.bf16.mxu0 0
        %1243 = vmatpush2.bf16.msra.mxu0 0
        %1244 = vmatprep.subr.bf16.mxu0 0
        %1245 = vmatpush2.bf16.msra.mxu0 0
        %1246 = vmatprep.subr.bf16.mxu0 0
        %1247 = vmatpush2.bf16.msra.mxu0 0
        %1248 = vmatprep.subr.bf16.mxu0 0
        %1249 = vmatpush2.bf16.msra.mxu0 0
        %1250 = vmatprep.subr.bf16.mxu0 0
        %1251 = vmatpush2.bf16.msra.mxu0 0
        %1252 = vmatprep.subr.bf16.mxu0 0
        %1253 = vmatpush2.bf16.msra.mxu0 0
        %1254 = vmatprep.subr.bf16.mxu0 0
        %1255 = vmatpush2.bf16.msra.mxu0 0
        %1256 = vmatprep.subr.bf16.mxu0 0
        %1257 = vmatpush2.bf16.msra.mxu0 0
        %1258 = vmatprep.mubr.bf16.mxu0 0
        %1259 = vmatmul.mubr.bf16.gmra.mxu0 %v1221
        %v1260 = vpop.f32.mrf.mxu0
        %v1261 = vadd.f32 0.0, %v1260
        %v1262 = vpop.f32.mrf.mxu0
        %v1263 = vpop.f32.mrf.mxu0
        %v1264 = vadd.f32 0.0, %v1263
        %v1265 = vpop.f32.mrf.mxu0
        %1266 = vdwg.mxu0
        %v1269 = vunpack.c.l.b16 %v891
        %v1270 = vunpack.c.l.b16 %v892
        %v1271 = vpack.c.b16 %v1270, %v1269
        %v1273 = vsel %vm906, %v1271, 0
        %v1276 = vsel %vm910, %v900, 0
        %1278 = vmatprep.subr.bf16.mxu0 0
        %1279 = vmatpush1.bf16.msra.mxu0 0
        %1280 = vmatprep.subr.bf16.mxu0 0
        %1281 = vmatpush1.bf16.msra.mxu0 0
        %1282 = vmatprep.subr.bf16.mxu0 0
        %1283 = vmatpush1.bf16.msra.mxu0 0
        %1284 = vmatprep.subr.bf16.mxu0 0
        %1285 = vmatpush1.bf16.msra.mxu0 0
        %1286 = vmatprep.subr.bf16.mxu0 0
        %1287 = vmatpush1.bf16.msra.mxu0 0
        %1288 = vmatprep.subr.bf16.mxu0 0
        %1289 = vmatpush1.bf16.msra.mxu0 0
        %1290 = vmatprep.subr.bf16.mxu0 0
        %1291 = vmatpush1.bf16.msra.mxu0 0
        %1292 = vmatprep.subr.bf16.mxu0 0
        %1293 = vmatpush1.bf16.msra.mxu0 %v1276
        %1294 = vmatprep.subr.bf16.mxu0 0
        %1295 = vmatpush2.bf16.msra.mxu0 0
        %1296 = vmatprep.subr.bf16.mxu0 0
        %1297 = vmatpush2.bf16.msra.mxu0 0
        %1298 = vmatprep.subr.bf16.mxu0 0
        %1299 = vmatpush2.bf16.msra.mxu0 0
        %1300 = vmatprep.subr.bf16.mxu0 0
        %1301 = vmatpush2.bf16.msra.mxu0 0
        %1302 = vmatprep.subr.bf16.mxu0 0
        %1303 = vmatpush2.bf16.msra.mxu0 0
        %1304 = vmatprep.subr.bf16.mxu0 0
        %1305 = vmatpush2.bf16.msra.mxu0 0
        %1306 = vmatprep.subr.bf16.mxu0 0
        %1307 = vmatpush2.bf16.msra.mxu0 0
        %1308 = vmatprep.subr.bf16.mxu0 0
        %1309 = vmatpush2.bf16.msra.mxu0 0
        %1310 = vmatprep.mubr.bf16.mxu0 0
        %1311 = vmatmul.mubr.bf16.gmra.mxu0 %v1273
        %v1312 = vpop.f32.mrf.mxu0
        %v1313 = vadd.f32 0.0, %v1312
        %v1314 = vpop.f32.mrf.mxu0
        %v1315 = vpop.f32.mrf.mxu0
        %v1316 = vadd.f32 0.0, %v1315
        %v1317 = vpop.f32.mrf.mxu0
        %1318 = vdwg.mxu0
        %vm1319 = vcmask 261120
        %v1320 = vsel %vm1319, %v949, -inf
        %1321 = vmax.xlane.f32.xlu0 %v1320
        %v1322 = vpop.xlane.xlu0 %1321
        %v1323 = vsel %vm1319, %v952, -inf
        %1324 = vmax.xlane.f32.xlu0 %v1323
        %v1325 = vpop.xlane.xlu0 %1324
        %v1326 = vsel %vm1319, %v1001, -inf
        %1327 = vmax.xlane.f32.xlu0 %v1326
        %v1328 = vpop.xlane.xlu0 %1327
        %v1329 = vsel %vm1319, %v1004, -inf
        %1330 = vmax.xlane.f32.xlu0 %v1329
        %v1331 = vpop.xlane.xlu0 %1330
        %v1332 = vsel %vm1319, %v1053, -inf
        %1333 = vmax.xlane.f32.xlu0 %v1332
        %v1334 = vpop.xlane.xlu0 %1333
        %v1335 = vsel %vm1319, %v1056, -inf
        %1336 = vmax.xlane.f32.xlu0 %v1335
        %v1337 = vpop.xlane.xlu0 %1336
        %v1338 = vsel %vm1319, %v1105, -inf
        %1339 = vmax.xlane.f32.xlu0 %v1338
        %v1340 = vpop.xlane.xlu0 %1339
        %v1341 = vsel %vm1319, %v1108, -inf
        %1342 = vmax.xlane.f32.xlu0 %v1341
        %v1343 = vpop.xlane.xlu0 %1342
        %v1344 = vsel %vm1319, %v1157, -inf
        %1345 = vmax.xlane.f32.xlu0 %v1344
        %v1346 = vpop.xlane.xlu0 %1345
        %v1347 = vsel %vm1319, %v1160, -inf
        %1348 = vmax.xlane.f32.xlu0 %v1347
        %v1349 = vpop.xlane.xlu0 %1348
        %v1350 = vsel %vm1319, %v1209, -inf
        %1351 = vmax.xlane.f32.xlu0 %v1350
        %v1352 = vpop.xlane.xlu0 %1351
        %v1353 = vsel %vm1319, %v1212, -inf
        %1354 = vmax.xlane.f32.xlu0 %v1353
        %v1355 = vpop.xlane.xlu0 %1354
        %v1356 = vsel %vm1319, %v1261, -inf
        %1357 = vmax.xlane.f32.xlu0 %v1356
        %v1358 = vpop.xlane.xlu0 %1357
        %v1359 = vsel %vm1319, %v1264, -inf
        %1360 = vmax.xlane.f32.xlu0 %v1359
        %v1361 = vpop.xlane.xlu0 %1360
        %v1362 = vsel %vm1319, %v1313, -inf
        %1363 = vmax.xlane.f32.xlu0 %v1362
        %v1364 = vpop.xlane.xlu0 %1363
        %v1365 = vsel %vm1319, %v1316, -inf
        %1366 = vmax.xlane.f32.xlu0 %v1365
        %v1367 = vpop.xlane.xlu0 %1366
        %v1368 = vsub.f32 %v949, %v1322
        %v1369 = vsub.f32 %v952, %v1325
        %v1370 = vsub.f32 %v1001, %v1328
        %v1371 = vsub.f32 %v1004, %v1331
        %v1372 = vsub.f32 %v1053, %v1334
        %v1373 = vsub.f32 %v1056, %v1337
        %v1374 = vsub.f32 %v1105, %v1340
        %v1375 = vsub.f32 %v1108, %v1343
        %v1376 = vsub.f32 %v1157, %v1346
        %v1377 = vsub.f32 %v1160, %v1349
        %v1378 = vsub.f32 %v1209, %v1352
        %v1379 = vsub.f32 %v1212, %v1355
        %v1380 = vsub.f32 %v1261, %v1358
        %v1381 = vsub.f32 %v1264, %v1361
        %v1382 = vsub.f32 %v1313, %v1364
        %v1383 = vsub.f32 %v1316, %v1367
        %v1384 = vmul.f32 %v1368, 1.442695
        %v1385 = vpow.pop %v1384
        %v1386 = vmul.f32 %v1369, 1.442695
        %v1387 = vpow.pop %v1386
        %v1388 = vmul.f32 %v1370, 1.442695
        %v1389 = vpow.pop %v1388
        %v1390 = vmul.f32 %v1371, 1.442695
        %v1391 = vpow.pop %v1390
        %v1392 = vmul.f32 %v1372, 1.442695
        %v1393 = vpow.pop %v1392
        %v1394 = vmul.f32 %v1373, 1.442695
        %v1395 = vpow.pop %v1394
        %v1396 = vmul.f32 %v1374, 1.442695
        %v1397 = vpow.pop %v1396
        %v1398 = vmul.f32 %v1375, 1.442695
        %v1399 = vpow.pop %v1398
        %v1400 = vmul.f32 %v1376, 1.442695
        %v1401 = vpow.pop %v1400
        %v1402 = vmul.f32 %v1377, 1.442695
        %v1403 = vpow.pop %v1402
        %v1404 = vmul.f32 %v1378, 1.442695
        %v1405 = vpow.pop %v1404
        %v1406 = vmul.f32 %v1379, 1.442695
        %v1407 = vpow.pop %v1406
        %v1408 = vmul.f32 %v1380, 1.442695
        %v1409 = vpow.pop %v1408
        %v1410 = vmul.f32 %v1381, 1.442695
        %v1411 = vpow.pop %v1410
        %v1412 = vmul.f32 %v1382, 1.442695
        %v1413 = vpow.pop %v1412
        %v1414 = vmul.f32 %v1383, 1.442695
        %v1415 = vpow.pop %v1414
        %v1416 = vsel %vm1319, %v1385, 0.0
        %1417 = vadd.xlane.f32.xlu0 %v1416
        %v1418 = vpop.xlane.xlu0 %1417
        %v1419 = vsel %vm1319, %v1387, 0.0
        %1420 = vadd.xlane.f32.xlu0 %v1419
        %v1421 = vpop.xlane.xlu0 %1420
        %v1422 = vsel %vm1319, %v1389, 0.0
        %1423 = vadd.xlane.f32.xlu0 %v1422
        %v1424 = vpop.xlane.xlu0 %1423
        %v1425 = vsel %vm1319, %v1391, 0.0
        %1426 = vadd.xlane.f32.xlu0 %v1425
        %v1427 = vpop.xlane.xlu0 %1426
        %v1428 = vsel %vm1319, %v1393, 0.0
        %1429 = vadd.xlane.f32.xlu0 %v1428
        %v1430 = vpop.xlane.xlu0 %1429
        %v1431 = vsel %vm1319, %v1395, 0.0
        %1432 = vadd.xlane.f32.xlu0 %v1431
        %v1433 = vpop.xlane.xlu0 %1432
        %v1434 = vsel %vm1319, %v1397, 0.0
        %1435 = vadd.xlane.f32.xlu0 %v1434
        %v1436 = vpop.xlane.xlu0 %1435
        %v1437 = vsel %vm1319, %v1399, 0.0
        %1438 = vadd.xlane.f32.xlu0 %v1437
        %v1439 = vpop.xlane.xlu0 %1438
        %v1440 = vsel %vm1319, %v1401, 0.0
        %1441 = vadd.xlane.f32.xlu0 %v1440
        %v1442 = vpop.xlane.xlu0 %1441
        %v1443 = vsel %vm1319, %v1403, 0.0
        %1444 = vadd.xlane.f32.xlu0 %v1443
        %v1445 = vpop.xlane.xlu0 %1444
        %v1446 = vsel %vm1319, %v1405, 0.0
        %1447 = vadd.xlane.f32.xlu0 %v1446
        %v1448 = vpop.xlane.xlu0 %1447
        %v1449 = vsel %vm1319, %v1407, 0.0
        %1450 = vadd.xlane.f32.xlu0 %v1449
        %v1451 = vpop.xlane.xlu0 %1450
        %v1452 = vsel %vm1319, %v1409, 0.0
        %1453 = vadd.xlane.f32.xlu0 %v1452
        %v1454 = vpop.xlane.xlu0 %1453
        %v1455 = vsel %vm1319, %v1411, 0.0
        %1456 = vadd.xlane.f32.xlu0 %v1455
        %v1457 = vpop.xlane.xlu0 %1456
        %v1458 = vsel %vm1319, %v1413, 0.0
        %1459 = vadd.xlane.f32.xlu0 %v1458
        %v1460 = vpop.xlane.xlu0 %1459
        %v1461 = vsel %vm1319, %v1415, 0.0
        %1462 = vadd.xlane.f32.xlu0 %v1461
        %v1463 = vpop.xlane.xlu0 %1462
        %v1464 = vrcp.pop %v1418
        %v1465 = vrcp.pop %v1421
        %v1466 = vrcp.pop %v1424
        %v1467 = vrcp.pop %v1427
        %v1468 = vrcp.pop %v1430
        %v1469 = vrcp.pop %v1433
        %v1470 = vrcp.pop %v1436
        %v1471 = vrcp.pop %v1439
        %v1472 = vrcp.pop %v1442
        %v1473 = vrcp.pop %v1445
        %v1474 = vrcp.pop %v1448
        %v1475 = vrcp.pop %v1451
        %v1476 = vrcp.pop %v1454
        %v1477 = vrcp.pop %v1457
        %v1478 = vrcp.pop %v1460
        %v1479 = vrcp.pop %v1463
        %v1480 = vmul.f32 %v1385, %v1464
        %v1481 = vmul.f32 %v1387, %v1465
        %v1482 = vmul.f32 %v1389, %v1466
        %v1483 = vmul.f32 %v1391, %v1467
        %v1484 = vmul.f32 %v1393, %v1468
        %v1485 = vmul.f32 %v1395, %v1469
        %v1486 = vmul.f32 %v1397, %v1470
        %v1487 = vmul.f32 %v1399, %v1471
        %v1488 = vmul.f32 %v1401, %v1472
        %v1489 = vmul.f32 %v1403, %v1473
        %v1490 = vmul.f32 %v1405, %v1474
        %v1491 = vmul.f32 %v1407, %v1475
        %v1492 = vmul.f32 %v1409, %v1476
        %v1493 = vmul.f32 %v1411, %v1477
        %v1494 = vmul.f32 %v1413, %v1478
        %v1495 = vmul.f32 %v1415, %v1479
        %v1496 = vpack.c.bf16 %v1481, %v1480
        %v1497 = vpack.c.bf16 %v1483, %v1482
        %v1498 = vpack.c.bf16 %v1485, %v1484
        %v1499 = vpack.c.bf16 %v1487, %v1486
        %v1500 = vpack.c.bf16 %v1489, %v1488
        %v1501 = vpack.c.bf16 %v1491, %v1490
        %v1502 = vpack.c.bf16 %v1493, %v1492
        %v1503 = vpack.c.bf16 %v1495, %v1494
        %v1512 = vunpack.c.l.b16 %v1496
        %v1513 = vunpack.c.h.b16 %v1496
        %v1514 = vunpack.c.l.b16 %v1497
        %v1515 = vunpack.c.h.b16 %v1497
        %v1516 = vunpack.c.l.b16 %v1498
        %v1517 = vunpack.c.h.b16 %v1498
        %v1518 = vunpack.c.l.b16 %v1499
        %v1519 = vunpack.c.h.b16 %v1499
        %v1520 = vunpack.c.l.b16 %v1500
        %v1521 = vunpack.c.h.b16 %v1500
        %v1522 = vunpack.c.l.b16 %v1501
        %v1523 = vunpack.c.h.b16 %v1501
        %v1524 = vunpack.c.l.b16 %v1502
        %v1525 = vunpack.c.h.b16 %v1502
        %v1526 = vunpack.c.l.b16 %v1503
        %v1527 = vunpack.c.h.b16 %v1503
        %v1528 = vpack.c.b16 %v1512, %v1512
        %v1529 = vpack.c.b16 %v1513, %v1513
        %v1530 = vpack.c.b16 %v1514, %v1514
        %v1531 = vpack.c.b16 %v1515, %v1515
        %v1532 = vpack.c.b16 %v1516, %v1516
        %v1533 = vpack.c.b16 %v1517, %v1517
        %v1534 = vpack.c.b16 %v1518, %v1518
        %v1535 = vpack.c.b16 %v1519, %v1519
        %v1536 = vpack.c.b16 %v1520, %v1520
        %v1537 = vpack.c.b16 %v1521, %v1521
        %v1538 = vpack.c.b16 %v1522, %v1522
        %v1539 = vpack.c.b16 %v1523, %v1523
        %v1540 = vpack.c.b16 %v1524, %v1524
        %v1541 = vpack.c.b16 %v1525, %v1525
        %v1542 = vpack.c.b16 %v1526, %v1526
        %v1543 = vpack.c.b16 %v1527, %v1527
        %vm1560 = vcmask 257024
        %1561 = vst.msk [vmem:[%s271] sm:$0xf] %vm1560, %v1528
        %1562 = vst.msk [vmem:[%s271 + $0x4] sm:$0xf] %vm1560, %v1529
        %1563 = vst.msk [vmem:[%s271 + $0x8] sm:$0xf] %vm1560, %v1530
        %1564 = vst.msk [vmem:[%s271 + $0xc] sm:$0xf] %vm1560, %v1531
        %1565 = vst.msk [vmem:[%s271 + $0x10] sm:$0xf] %vm1560, %v1532
        %1566 = vst.msk [vmem:[%s271 + $0x14] sm:$0xf] %vm1560, %v1533
        %1567 = vst.msk [vmem:[%s271 + $0x18] sm:$0xf] %vm1560, %v1534
        %1568 = vst.msk [vmem:[%s271 + $0x1c] sm:$0xf] %vm1560, %v1535
        %1569 = vst.msk [vmem:[%s271 + $0x20] sm:$0xf] %vm1560, %v1536
        %1570 = vst.msk [vmem:[%s271 + $0x24] sm:$0xf] %vm1560, %v1537
        %1571 = vst.msk [vmem:[%s271 + $0x28] sm:$0xf] %vm1560, %v1538
        %1572 = vst.msk [vmem:[%s271 + $0x2c] sm:$0xf] %vm1560, %v1539
        %1573 = vst.msk [vmem:[%s271 + $0x30] sm:$0xf] %vm1560, %v1540
        %1574 = vst.msk [vmem:[%s271 + $0x34] sm:$0xf] %vm1560, %v1541
        %1575 = vst.msk [vmem:[%s271 + $0x38] sm:$0xf] %vm1560, %v1542
        %1576 = vst.msk [vmem:[%s271 + $0x3c] sm:$0xf] %vm1560, %v1543
        %v1577 = vld [vmem:[#allocation4] sm:$0xf]
        %v1578 = vld [vmem:[#allocation4 + $0x4] sm:$0xf]
        %v1579 = vld [vmem:[#allocation4 + $0x8] sm:$0xf]
        %v1580 = vld [vmem:[#allocation4 + $0xc] sm:$0xf]
        %v1581 = vld [vmem:[#allocation4 + $0x10] sm:$0xf]
        %v1582 = vld [vmem:[#allocation4 + $0x14] sm:$0xf]
        %v1583 = vld [vmem:[#allocation4 + $0x18] sm:$0xf]
        %v1584 = vld [vmem:[#allocation4 + $0x1c] sm:$0xf]
        %v1585 = vld [vmem:[#allocation4 + $0x20] sm:$0xf]
        %v1586 = vld [vmem:[#allocation4 + $0x24] sm:$0xf]
        %v1587 = vld [vmem:[#allocation4 + $0x28] sm:$0xf]
        %v1588 = vld [vmem:[#allocation4 + $0x2c] sm:$0xf]
        %v1589 = vld [vmem:[#allocation4 + $0x30] sm:$0xf]
        %v1590 = vld [vmem:[#allocation4 + $0x34] sm:$0xf]
        %v1591 = vld [vmem:[#allocation4 + $0x38] sm:$0xf]
        %v1592 = vld [vmem:[#allocation4 + $0x3c] sm:$0xf]
        %v1593 = vld [vmem:[#allocation4 + $0x40] sm:$0xf]
        %v1594 = vld [vmem:[#allocation4 + $0x44] sm:$0xf]
        %v1595 = vld [vmem:[#allocation4 + $0x48] sm:$0xf]
        %v1596 = vld [vmem:[#allocation4 + $0x4c] sm:$0xf]
        %v1597 = vld [vmem:[#allocation4 + $0x50] sm:$0xf]
        %v1598 = vld [vmem:[#allocation4 + $0x54] sm:$0xf]
        %v1599 = vld [vmem:[#allocation4 + $0x58] sm:$0xf]
        %v1600 = vld [vmem:[#allocation4 + $0x5c] sm:$0xf]
        %v1601 = vld [vmem:[#allocation4 + $0x60] sm:$0xf]
        %v1602 = vld [vmem:[#allocation4 + $0x64] sm:$0xf]
        %v1603 = vld [vmem:[#allocation4 + $0x68] sm:$0xf]
        %v1604 = vld [vmem:[#allocation4 + $0x6c] sm:$0xf]
        %v1605 = vld [vmem:[#allocation4 + $0x70] sm:$0xf]
        %v1606 = vld [vmem:[#allocation4 + $0x74] sm:$0xf]
        %v1607 = vld [vmem:[#allocation4 + $0x78] sm:$0xf]
        %v1608 = vld [vmem:[#allocation4 + $0x7c] sm:$0xf]
        %v1613 = vunpack.c.l.b16 %v1577
        %v1614 = vunpack.c.l.b16 %v1578
        %v1615 = vunpack.c.l.b16 %v1579
        %v1616 = vunpack.c.l.b16 %v1580
        %v1617 = vpack.c.b16 %v1614, %v1613
        %v1618 = vpack.c.b16 %v1616, %v1615
        %v1622 = vsel %vm1319, %v1496, 0
        %1624 = vmatprep.subr.bf16.mxu0 0
        %1625 = vmatpush1.bf16.msra.mxu0 0
        %1626 = vmatprep.subr.bf16.mxu0 0
        %1627 = vmatpush1.bf16.msra.mxu0 0
        %1628 = vmatprep.subr.bf16.mxu0 0
        %1629 = vmatpush1.bf16.msra.mxu0 0
        %1630 = vmatprep.subr.bf16.mxu0 0
        %1631 = vmatpush1.bf16.msra.mxu0 0
        %1632 = vmatprep.subr.bf16.mxu0 0
        %1633 = vmatpush1.bf16.msra.mxu0 0
        %1634 = vmatprep.subr.bf16.mxu0 0
        %1635 = vmatpush1.bf16.msra.mxu0 0
        %1636 = vmatprep.subr.bf16.mxu0 0
        %1637 = vmatpush1.bf16.msra.mxu0 %v1618
        %1638 = vmatprep.subr.bf16.mxu0 0
        %1639 = vmatpush1.bf16.msra.mxu0 %v1617
        %1640 = vmatprep.subr.bf16.mxu0 0
        %1641 = vmatpush2.bf16.msra.mxu0 0
        %1642 = vmatprep.subr.bf16.mxu0 0
        %1643 = vmatpush2.bf16.msra.mxu0 0
        %1644 = vmatprep.subr.bf16.mxu0 0
        %1645 = vmatpush2.bf16.msra.mxu0 0
        %1646 = vmatprep.subr.bf16.mxu0 0
        %1647 = vmatpush2.bf16.msra.mxu0 0
        %1648 = vmatprep.subr.bf16.mxu0 0
        %1649 = vmatpush2.bf16.msra.mxu0 0
        %1650 = vmatprep.subr.bf16.mxu0 0
        %1651 = vmatpush2.bf16.msra.mxu0 0
        %1652 = vmatprep.subr.bf16.mxu0 0
        %1653 = vmatpush2.bf16.msra.mxu0 0
        %1654 = vmatprep.subr.bf16.mxu0 0
        %1655 = vmatpush2.bf16.msra.mxu0 0
        %1656 = vmatprep.mubr.bf16.mxu0 0
        %1657 = vmatmul.mubr.bf16.gmra.mxu0 %v1622
        %v1658 = vpop.f32.mrf.mxu0
        %v1659 = vadd.f32 0.0, %v1658
        %v1660 = vpop.f32.mrf.mxu0
        %v1661 = vpop.f32.mrf.mxu0
        %v1662 = vadd.f32 0.0, %v1661
        %v1663 = vpop.f32.mrf.mxu0
        %1664 = vdwg.mxu0
        %v1669 = vunpack.c.l.b16 %v1581
        %v1670 = vunpack.c.l.b16 %v1582
        %v1671 = vunpack.c.l.b16 %v1583
        %v1672 = vunpack.c.l.b16 %v1584
        %v1673 = vpack.c.b16 %v1670, %v1669
        %v1674 = vpack.c.b16 %v1672, %v1671
        %v1678 = vsel %vm1319, %v1497, 0
        %1680 = vmatprep.subr.bf16.mxu0 0
        %1681 = vmatpush1.bf16.msra.mxu0 0
        %1682 = vmatprep.subr.bf16.mxu0 0
        %1683 = vmatpush1.bf16.msra.mxu0 0
        %1684 = vmatprep.subr.bf16.mxu0 0
        %1685 = vmatpush1.bf16.msra.mxu0 0
        %1686 = vmatprep.subr.bf16.mxu0 0
        %1687 = vmatpush1.bf16.msra.mxu0 0
        %1688 = vmatprep.subr.bf16.mxu0 0
        %1689 = vmatpush1.bf16.msra.mxu0 0
        %1690 = vmatprep.subr.bf16.mxu0 0
        %1691 = vmatpush1.bf16.msra.mxu0 0
        %1692 = vmatprep.subr.bf16.mxu0 0
        %1693 = vmatpush1.bf16.msra.mxu0 %v1674
        %1694 = vmatprep.subr.bf16.mxu0 0
        %1695 = vmatpush1.bf16.msra.mxu0 %v1673
        %1696 = vmatprep.subr.bf16.mxu0 0
        %1697 = vmatpush2.bf16.msra.mxu0 0
        %1698 = vmatprep.subr.bf16.mxu0 0
        %1699 = vmatpush2.bf16.msra.mxu0 0
        %1700 = vmatprep.subr.bf16.mxu0 0
        %1701 = vmatpush2.bf16.msra.mxu0 0
        %1702 = vmatprep.subr.bf16.mxu0 0
        %1703 = vmatpush2.bf16.msra.mxu0 0
        %1704 = vmatprep.subr.bf16.mxu0 0
        %1705 = vmatpush2.bf16.msra.mxu0 0
        %1706 = vmatprep.subr.bf16.mxu0 0
        %1707 = vmatpush2.bf16.msra.mxu0 0
        %1708 = vmatprep.subr.bf16.mxu0 0
        %1709 = vmatpush2.bf16.msra.mxu0 0
        %1710 = vmatprep.subr.bf16.mxu0 0
        %1711 = vmatpush2.bf16.msra.mxu0 0
        %1712 = vmatprep.mubr.bf16.mxu0 0
        %1713 = vmatmul.mubr.bf16.gmra.mxu0 %v1678
        %v1714 = vpop.f32.mrf.mxu0
        %v1715 = vadd.f32 0.0, %v1714
        %v1716 = vpop.f32.mrf.mxu0
        %v1717 = vpop.f32.mrf.mxu0
        %v1718 = vadd.f32 0.0, %v1717
        %v1719 = vpop.f32.mrf.mxu0
        %1720 = vdwg.mxu0
        %v1725 = vunpack.c.l.b16 %v1585
        %v1726 = vunpack.c.l.b16 %v1586
        %v1727 = vunpack.c.l.b16 %v1587
        %v1728 = vunpack.c.l.b16 %v1588
        %v1729 = vpack.c.b16 %v1726, %v1725
        %v1730 = vpack.c.b16 %v1728, %v1727
        %v1734 = vsel %vm1319, %v1498, 0
        %1736 = vmatprep.subr.bf16.mxu0 0
        %1737 = vmatpush1.bf16.msra.mxu0 0
        %1738 = vmatprep.subr.bf16.mxu0 0
        %1739 = vmatpush1.bf16.msra.mxu0 0
        %1740 = vmatprep.subr.bf16.mxu0 0
        %1741 = vmatpush1.bf16.msra.mxu0 0
        %1742 = vmatprep.subr.bf16.mxu0 0
        %1743 = vmatpush1.bf16.msra.mxu0 0
        %1744 = vmatprep.subr.bf16.mxu0 0
        %1745 = vmatpush1.bf16.msra.mxu0 0
        %1746 = vmatprep.subr.bf16.mxu0 0
        %1747 = vmatpush1.bf16.msra.mxu0 0
        %1748 = vmatprep.subr.bf16.mxu0 0
        %1749 = vmatpush1.bf16.msra.mxu0 %v1730
        %1750 = vmatprep.subr.bf16.mxu0 0
        %1751 = vmatpush1.bf16.msra.mxu0 %v1729
        %1752 = vmatprep.subr.bf16.mxu0 0
        %1753 = vmatpush2.bf16.msra.mxu0 0
        %1754 = vmatprep.subr.bf16.mxu0 0
        %1755 = vmatpush2.bf16.msra.mxu0 0
        %1756 = vmatprep.subr.bf16.mxu0 0
        %1757 = vmatpush2.bf16.msra.mxu0 0
        %1758 = vmatprep.subr.bf16.mxu0 0
        %1759 = vmatpush2.bf16.msra.mxu0 0
        %1760 = vmatprep.subr.bf16.mxu0 0
        %1761 = vmatpush2.bf16.msra.mxu0 0
        %1762 = vmatprep.subr.bf16.mxu0 0
        %1763 = vmatpush2.bf16.msra.mxu0 0
        %1764 = vmatprep.subr.bf16.mxu0 0
        %1765 = vmatpush2.bf16.msra.mxu0 0
        %1766 = vmatprep.subr.bf16.mxu0 0
        %1767 = vmatpush2.bf16.msra.mxu0 0
        %1768 = vmatprep.mubr.bf16.mxu0 0
        %1769 = vmatmul.mubr.bf16.gmra.mxu0 %v1734
        %v1770 = vpop.f32.mrf.mxu0
        %v1771 = vadd.f32 0.0, %v1770
        %v1772 = vpop.f32.mrf.mxu0
        %v1773 = vpop.f32.mrf.mxu0
        %v1774 = vadd.f32 0.0, %v1773
        %v1775 = vpop.f32.mrf.mxu0
        %1776 = vdwg.mxu0
        %v1781 = vunpack.c.l.b16 %v1589
        %v1782 = vunpack.c.l.b16 %v1590
        %v1783 = vunpack.c.l.b16 %v1591
        %v1784 = vunpack.c.l.b16 %v1592
        %v1785 = vpack.c.b16 %v1782, %v1781
        %v1786 = vpack.c.b16 %v1784, %v1783
        %v1790 = vsel %vm1319, %v1499, 0
        %1792 = vmatprep.subr.bf16.mxu0 0
        %1793 = vmatpush1.bf16.msra.mxu0 0
        %1794 = vmatprep.subr.bf16.mxu0 0
        %1795 = vmatpush1.bf16.msra.mxu0 0
        %1796 = vmatprep.subr.bf16.mxu0 0
        %1797 = vmatpush1.bf16.msra.mxu0 0
        %1798 = vmatprep.subr.bf16.mxu0 0
        %1799 = vmatpush1.bf16.msra.mxu0 0
        %1800 = vmatprep.subr.bf16.mxu0 0
        %1801 = vmatpush1.bf16.msra.mxu0 0
        %1802 = vmatprep.subr.bf16.mxu0 0
        %1803 = vmatpush1.bf16.msra.mxu0 0
        %1804 = vmatprep.subr.bf16.mxu0 0
        %1805 = vmatpush1.bf16.msra.mxu0 %v1786
        %1806 = vmatprep.subr.bf16.mxu0 0
        %1807 = vmatpush1.bf16.msra.mxu0 %v1785
        %1808 = vmatprep.subr.bf16.mxu0 0
        %1809 = vmatpush2.bf16.msra.mxu0 0
        %1810 = vmatprep.subr.bf16.mxu0 0
        %1811 = vmatpush2.bf16.msra.mxu0 0
        %1812 = vmatprep.subr.bf16.mxu0 0
        %1813 = vmatpush2.bf16.msra.mxu0 0
        %1814 = vmatprep.subr.bf16.mxu0 0
        %1815 = vmatpush2.bf16.msra.mxu0 0
        %1816 = vmatprep.subr.bf16.mxu0 0
        %1817 = vmatpush2.bf16.msra.mxu0 0
        %1818 = vmatprep.subr.bf16.mxu0 0
        %1819 = vmatpush2.bf16.msra.mxu0 0
        %1820 = vmatprep.subr.bf16.mxu0 0
        %1821 = vmatpush2.bf16.msra.mxu0 0
        %1822 = vmatprep.subr.bf16.mxu0 0
        %1823 = vmatpush2.bf16.msra.mxu0 0
        %1824 = vmatprep.mubr.bf16.mxu0 0
        %1825 = vmatmul.mubr.bf16.gmra.mxu0 %v1790
        %v1826 = vpop.f32.mrf.mxu0
        %v1827 = vadd.f32 0.0, %v1826
        %v1828 = vpop.f32.mrf.mxu0
        %v1829 = vpop.f32.mrf.mxu0
        %v1830 = vadd.f32 0.0, %v1829
        %v1831 = vpop.f32.mrf.mxu0
        %1832 = vdwg.mxu0
        %v1837 = vunpack.c.l.b16 %v1593
        %v1838 = vunpack.c.l.b16 %v1594
        %v1839 = vunpack.c.l.b16 %v1595
        %v1840 = vunpack.c.l.b16 %v1596
        %v1841 = vpack.c.b16 %v1838, %v1837
        %v1842 = vpack.c.b16 %v1840, %v1839
        %v1846 = vsel %vm1319, %v1500, 0
        %1848 = vmatprep.subr.bf16.mxu0 0
        %1849 = vmatpush1.bf16.msra.mxu0 0
        %1850 = vmatprep.subr.bf16.mxu0 0
        %1851 = vmatpush1.bf16.msra.mxu0 0
        %1852 = vmatprep.subr.bf16.mxu0 0
        %1853 = vmatpush1.bf16.msra.mxu0 0
        %1854 = vmatprep.subr.bf16.mxu0 0
        %1855 = vmatpush1.bf16.msra.mxu0 0
        %1856 = vmatprep.subr.bf16.mxu0 0
        %1857 = vmatpush1.bf16.msra.mxu0 0
        %1858 = vmatprep.subr.bf16.mxu0 0
        %1859 = vmatpush1.bf16.msra.mxu0 0
        %1860 = vmatprep.subr.bf16.mxu0 0
        %1861 = vmatpush1.bf16.msra.mxu0 %v1842
        %1862 = vmatprep.subr.bf16.mxu0 0
        %1863 = vmatpush1.bf16.msra.mxu0 %v1841
        %1864 = vmatprep.subr.bf16.mxu0 0
        %1865 = vmatpush2.bf16.msra.mxu0 0
        %1866 = vmatprep.subr.bf16.mxu0 0
        %1867 = vmatpush2.bf16.msra.mxu0 0
        %1868 = vmatprep.subr.bf16.mxu0 0
        %1869 = vmatpush2.bf16.msra.mxu0 0
        %1870 = vmatprep.subr.bf16.mxu0 0
        %1871 = vmatpush2.bf16.msra.mxu0 0
        %1872 = vmatprep.subr.bf16.mxu0 0
        %1873 = vmatpush2.bf16.msra.mxu0 0
        %1874 = vmatprep.subr.bf16.mxu0 0
        %1875 = vmatpush2.bf16.msra.mxu0 0
        %1876 = vmatprep.subr.bf16.mxu0 0
        %1877 = vmatpush2.bf16.msra.mxu0 0
        %1878 = vmatprep.subr.bf16.mxu0 0
        %1879 = vmatpush2.bf16.msra.mxu0 0
        %1880 = vmatprep.mubr.bf16.mxu0 0
        %1881 = vmatmul.mubr.bf16.gmra.mxu0 %v1846
        %v1882 = vpop.f32.mrf.mxu0
        %v1883 = vadd.f32 0.0, %v1882
        %v1884 = vpop.f32.mrf.mxu0
        %v1885 = vpop.f32.mrf.mxu0
        %v1886 = vadd.f32 0.0, %v1885
        %v1887 = vpop.f32.mrf.mxu0
        %1888 = vdwg.mxu0
        %v1893 = vunpack.c.l.b16 %v1597
        %v1894 = vunpack.c.l.b16 %v1598
        %v1895 = vunpack.c.l.b16 %v1599
        %v1896 = vunpack.c.l.b16 %v1600
        %v1897 = vpack.c.b16 %v1894, %v1893
        %v1898 = vpack.c.b16 %v1896, %v1895
        %v1902 = vsel %vm1319, %v1501, 0
        %1904 = vmatprep.subr.bf16.mxu0 0
        %1905 = vmatpush1.bf16.msra.mxu0 0
        %1906 = vmatprep.subr.bf16.mxu0 0
        %1907 = vmatpush1.bf16.msra.mxu0 0
        %1908 = vmatprep.subr.bf16.mxu0 0
        %1909 = vmatpush1.bf16.msra.mxu0 0
        %1910 = vmatprep.subr.bf16.mxu0 0
        %1911 = vmatpush1.bf16.msra.mxu0 0
        %1912 = vmatprep.subr.bf16.mxu0 0
        %1913 = vmatpush1.bf16.msra.mxu0 0
        %1914 = vmatprep.subr.bf16.mxu0 0
        %1915 = vmatpush1.bf16.msra.mxu0 0
        %1916 = vmatprep.subr.bf16.mxu0 0
        %1917 = vmatpush1.bf16.msra.mxu0 %v1898
        %1918 = vmatprep.subr.bf16.mxu0 0
        %1919 = vmatpush1.bf16.msra.mxu0 %v1897
        %1920 = vmatprep.subr.bf16.mxu0 0
        %1921 = vmatpush2.bf16.msra.mxu0 0
        %1922 = vmatprep.subr.bf16.mxu0 0
        %1923 = vmatpush2.bf16.msra.mxu0 0
        %1924 = vmatprep.subr.bf16.mxu0 0
        %1925 = vmatpush2.bf16.msra.mxu0 0
        %1926 = vmatprep.subr.bf16.mxu0 0
        %1927 = vmatpush2.bf16.msra.mxu0 0
        %1928 = vmatprep.subr.bf16.mxu0 0
        %1929 = vmatpush2.bf16.msra.mxu0 0
        %1930 = vmatprep.subr.bf16.mxu0 0
        %1931 = vmatpush2.bf16.msra.mxu0 0
        %1932 = vmatprep.subr.bf16.mxu0 0
        %1933 = vmatpush2.bf16.msra.mxu0 0
        %1934 = vmatprep.subr.bf16.mxu0 0
        %1935 = vmatpush2.bf16.msra.mxu0 0
        %1936 = vmatprep.mubr.bf16.mxu0 0
        %1937 = vmatmul.mubr.bf16.gmra.mxu0 %v1902
        %v1938 = vpop.f32.mrf.mxu0
        %v1939 = vadd.f32 0.0, %v1938
        %v1940 = vpop.f32.mrf.mxu0
        %v1941 = vpop.f32.mrf.mxu0
        %v1942 = vadd.f32 0.0, %v1941
        %v1943 = vpop.f32.mrf.mxu0
        %1944 = vdwg.mxu0
        %v1949 = vunpack.c.l.b16 %v1601
        %v1950 = vunpack.c.l.b16 %v1602
        %v1951 = vunpack.c.l.b16 %v1603
        %v1952 = vunpack.c.l.b16 %v1604
        %v1953 = vpack.c.b16 %v1950, %v1949
        %v1954 = vpack.c.b16 %v1952, %v1951
        %v1958 = vsel %vm1319, %v1502, 0
        %1960 = vmatprep.subr.bf16.mxu0 0
        %1961 = vmatpush1.bf16.msra.mxu0 0
        %1962 = vmatprep.subr.bf16.mxu0 0
        %1963 = vmatpush1.bf16.msra.mxu0 0
        %1964 = vmatprep.subr.bf16.mxu0 0
        %1965 = vmatpush1.bf16.msra.mxu0 0
        %1966 = vmatprep.subr.bf16.mxu0 0
        %1967 = vmatpush1.bf16.msra.mxu0 0
        %1968 = vmatprep.subr.bf16.mxu0 0
        %1969 = vmatpush1.bf16.msra.mxu0 0
        %1970 = vmatprep.subr.bf16.mxu0 0
        %1971 = vmatpush1.bf16.msra.mxu0 0
        %1972 = vmatprep.subr.bf16.mxu0 0
        %1973 = vmatpush1.bf16.msra.mxu0 %v1954
        %1974 = vmatprep.subr.bf16.mxu0 0
        %1975 = vmatpush1.bf16.msra.mxu0 %v1953
        %1976 = vmatprep.subr.bf16.mxu0 0
        %1977 = vmatpush2.bf16.msra.mxu0 0
        %1978 = vmatprep.subr.bf16.mxu0 0
        %1979 = vmatpush2.bf16.msra.mxu0 0
        %1980 = vmatprep.subr.bf16.mxu0 0
        %1981 = vmatpush2.bf16.msra.mxu0 0
        %1982 = vmatprep.subr.bf16.mxu0 0
        %1983 = vmatpush2.bf16.msra.mxu0 0
        %1984 = vmatprep.subr.bf16.mxu0 0
        %1985 = vmatpush2.bf16.msra.mxu0 0
        %1986 = vmatprep.subr.bf16.mxu0 0
        %1987 = vmatpush2.bf16.msra.mxu0 0
        %1988 = vmatprep.subr.bf16.mxu0 0
        %1989 = vmatpush2.bf16.msra.mxu0 0
        %1990 = vmatprep.subr.bf16.mxu0 0
        %1991 = vmatpush2.bf16.msra.mxu0 0
        %1992 = vmatprep.mubr.bf16.mxu0 0
        %1993 = vmatmul.mubr.bf16.gmra.mxu0 %v1958
        %v1994 = vpop.f32.mrf.mxu0
        %v1995 = vadd.f32 0.0, %v1994
        %v1996 = vpop.f32.mrf.mxu0
        %v1997 = vpop.f32.mrf.mxu0
        %v1998 = vadd.f32 0.0, %v1997
        %v1999 = vpop.f32.mrf.mxu0
        %2000 = vdwg.mxu0
        %v2005 = vunpack.c.l.b16 %v1605
        %v2006 = vunpack.c.l.b16 %v1606
        %v2007 = vunpack.c.l.b16 %v1607
        %v2008 = vunpack.c.l.b16 %v1608
        %v2009 = vpack.c.b16 %v2006, %v2005
        %v2010 = vpack.c.b16 %v2008, %v2007
        %v2014 = vsel %vm1319, %v1503, 0
        %2016 = vmatprep.subr.bf16.mxu0 0
        %2017 = vmatpush1.bf16.msra.mxu0 0
        %2018 = vmatprep.subr.bf16.mxu0 0
        %2019 = vmatpush1.bf16.msra.mxu0 0
        %2020 = vmatprep.subr.bf16.mxu0 0
        %2021 = vmatpush1.bf16.msra.mxu0 0
        %2022 = vmatprep.subr.bf16.mxu0 0
        %2023 = vmatpush1.bf16.msra.mxu0 0
        %2024 = vmatprep.subr.bf16.mxu0 0
        %2025 = vmatpush1.bf16.msra.mxu0 0
        %2026 = vmatprep.subr.bf16.mxu0 0
        %2027 = vmatpush1.bf16.msra.mxu0 0
        %2028 = vmatprep.subr.bf16.mxu0 0
        %2029 = vmatpush1.bf16.msra.mxu0 %v2010
        %2030 = vmatprep.subr.bf16.mxu0 0
        %2031 = vmatpush1.bf16.msra.mxu0 %v2009
        %2032 = vmatprep.subr.bf16.mxu0 0
        %2033 = vmatpush2.bf16.msra.mxu0 0
        %2034 = vmatprep.subr.bf16.mxu0 0
        %2035 = vmatpush2.bf16.msra.mxu0 0
        %2036 = vmatprep.subr.bf16.mxu0 0
        %2037 = vmatpush2.bf16.msra.mxu0 0
        %2038 = vmatprep.subr.bf16.mxu0 0
        %2039 = vmatpush2.bf16.msra.mxu0 0
        %2040 = vmatprep.subr.bf16.mxu0 0
        %2041 = vmatpush2.bf16.msra.mxu0 0
        %2042 = vmatprep.subr.bf16.mxu0 0
        %2043 = vmatpush2.bf16.msra.mxu0 0
        %2044 = vmatprep.subr.bf16.mxu0 0
        %2045 = vmatpush2.bf16.msra.mxu0 0
        %2046 = vmatprep.subr.bf16.mxu0 0
        %2047 = vmatpush2.bf16.msra.mxu0 0
        %2048 = vmatprep.mubr.bf16.mxu0 0
        %2049 = vmatmul.mubr.bf16.gmra.mxu0 %v2014
        %v2050 = vpop.f32.mrf.mxu0
        %v2051 = vadd.f32 0.0, %v2050
        %v2052 = vpop.f32.mrf.mxu0
        %v2053 = vpop.f32.mrf.mxu0
        %v2054 = vadd.f32 0.0, %v2053
        %v2055 = vpop.f32.mrf.mxu0
        %2056 = vdwg.mxu0
        %v2057 = vpack.c.bf16 %v1662, %v1659
        %v2059 = vunpack.c.l.b16 %v2057
        %v2060 = vunpack.c.h.b16 %v2057
        %v2061 = vpack.c.b16 %v2059, %v2059
        %v2062 = vpack.c.b16 %v2060, %v2060
        %vm2065 = vcmask 60416
        %2066 = vst.msk [vmem:[#allocation5] sm:$0xf] %vm2065, %v2061
        %2067 = vst.msk [vmem:[#allocation5 + $0x4] sm:$0xf] %vm2065, %v2062
        %v2068 = vpack.c.bf16 %v1718, %v1715
        %v2070 = vunpack.c.l.b16 %v2068
        %v2071 = vunpack.c.h.b16 %v2068
        %v2072 = vpack.c.b16 %v2070, %v2070
        %v2073 = vpack.c.b16 %v2071, %v2071
        %2074 = vrot.lane.b32.xlu0 %v2072, 8
        %v2075 = vpop.permute.xlu0 %2074
        %2076 = vrot.lane.b32.xlu0 %v2073, 8
        %v2077 = vpop.permute.xlu0 %2076
        %vm2080 = vcmask 126016
        %2081 = vst.msk [vmem:[#allocation5] sm:$0xf] %vm2080, %v2075
        %2082 = vst.msk [vmem:[#allocation5 + $0x4] sm:$0xf] %vm2080, %v2077
        %v2083 = vpack.c.bf16 %v1774, %v1771
        %v2085 = vunpack.c.l.b16 %v2083
        %v2086 = vunpack.c.h.b16 %v2083
        %v2087 = vpack.c.b16 %v2085, %v2085
        %v2088 = vpack.c.b16 %v2086, %v2086
        %2089 = vrot.lane.b32.xlu0 %v2087, 16
        %v2090 = vpop.permute.xlu0 %2089
        %2091 = vrot.lane.b32.xlu0 %v2088, 16
        %v2092 = vpop.permute.xlu0 %2091
        %vm2095 = vcmask 191616
        %2096 = vst.msk [vmem:[#allocation5] sm:$0xf] %vm2095, %v2090
        %2097 = vst.msk [vmem:[#allocation5 + $0x4] sm:$0xf] %vm2095, %v2092
        %v2098 = vpack.c.bf16 %v1830, %v1827
        %v2100 = vunpack.c.l.b16 %v2098
        %v2101 = vunpack.c.h.b16 %v2098
        %v2102 = vpack.c.b16 %v2100, %v2100
        %v2103 = vpack.c.b16 %v2101, %v2101
        %2104 = vrot.lane.b32.xlu0 %v2102, 24
        %v2105 = vpop.permute.xlu0 %2104
        %2106 = vrot.lane.b32.xlu0 %v2103, 24
        %v2107 = vpop.permute.xlu0 %2106
        %vm2110 = vcmask 257216
        %2111 = vst.msk [vmem:[#allocation5] sm:$0xf] %vm2110, %v2105
        %2112 = vst.msk [vmem:[#allocation5 + $0x4] sm:$0xf] %vm2110, %v2107
        %v2113 = vpack.c.bf16 %v1886, %v1883
        %v2115 = vunpack.c.l.b16 %v2113
        %v2116 = vunpack.c.h.b16 %v2113
        %v2117 = vpack.c.b16 %v2115, %v2115
        %v2118 = vpack.c.b16 %v2116, %v2116
        %2119 = vrot.lane.b32.xlu0 %v2117, 32
        %v2120 = vpop.permute.xlu0 %2119
        %2121 = vrot.lane.b32.xlu0 %v2118, 32
        %v2122 = vpop.permute.xlu0 %2121
        %vm2125 = vcmask 322816
        %2126 = vst.msk [vmem:[#allocation5] sm:$0xf] %vm2125, %v2120
        %2127 = vst.msk [vmem:[#allocation5 + $0x4] sm:$0xf] %vm2125, %v2122
        %v2128 = vpack.c.bf16 %v1942, %v1939
        %v2130 = vunpack.c.l.b16 %v2128
        %v2131 = vunpack.c.h.b16 %v2128
        %v2132 = vpack.c.b16 %v2130, %v2130
        %v2133 = vpack.c.b16 %v2131, %v2131
        %2134 = vrot.lane.b32.xlu0 %v2132, 40
        %v2135 = vpop.permute.xlu0 %2134
        %2136 = vrot.lane.b32.xlu0 %v2133, 40
        %v2137 = vpop.permute.xlu0 %2136
        %vm2140 = vcmask 388416
        %2141 = vst.msk [vmem:[#allocation5] sm:$0xf] %vm2140, %v2135
        %2142 = vst.msk [vmem:[#allocation5 + $0x4] sm:$0xf] %vm2140, %v2137
        %v2143 = vpack.c.bf16 %v1998, %v1995
        %v2145 = vunpack.c.l.b16 %v2143
        %v2146 = vunpack.c.h.b16 %v2143
        %v2147 = vpack.c.b16 %v2145, %v2145
        %v2148 = vpack.c.b16 %v2146, %v2146
        %2149 = vrot.lane.b32.xlu0 %v2147, 48
        %v2150 = vpop.permute.xlu0 %2149
        %2151 = vrot.lane.b32.xlu0 %v2148, 48
        %v2152 = vpop.permute.xlu0 %2151
        %vm2155 = vcmask 454016
        %2156 = vst.msk [vmem:[#allocation5] sm:$0xf] %vm2155, %v2150
        %2157 = vst.msk [vmem:[#allocation5 + $0x4] sm:$0xf] %vm2155, %v2152
        %v2158 = vpack.c.bf16 %v2054, %v2051
        %v2160 = vunpack.c.l.b16 %v2158
        %v2161 = vunpack.c.h.b16 %v2158
        %v2162 = vpack.c.b16 %v2160, %v2160
        %v2163 = vpack.c.b16 %v2161, %v2161
        %2164 = vrot.lane.b32.xlu0 %v2162, 56
        %v2165 = vpop.permute.xlu0 %2164
        %2166 = vrot.lane.b32.xlu0 %v2163, 56
        %v2167 = vpop.permute.xlu0 %2166
        %vm2170 = vcmask 519616
        %2171 = vst.msk [vmem:[#allocation5] sm:$0xf] %vm2170, %v2165
        %2172 = vst.msk [vmem:[#allocation5 + $0x4] sm:$0xf] %vm2170, %v2167
        %v2173 = vld [vmem:[#allocation5] sm:$0xf]
        %v2174 = vld [vmem:[#allocation5 + $0x4] sm:$0xf]
        %v2175 = vld [vmem:[#allocation11] sm:$0xf]
        %v2176 = vld [vmem:[#allocation11 + $0x4] sm:$0xf]
        %v2177 = vld [vmem:[#allocation11 + $0x8] sm:$0xf]
        %v2178 = vld [vmem:[#allocation11 + $0xc] sm:$0xf]
        %v2179 = vld [vmem:[#allocation11 + $0x10] sm:$0xf]
        %v2180 = vld [vmem:[#allocation11 + $0x14] sm:$0xf]
        %v2181 = vld [vmem:[#allocation11 + $0x18] sm:$0xf]
        %v2182 = vld [vmem:[#allocation11 + $0x1c] sm:$0xf]
        %v2185 = vunpack.c.l.b16 %v2173
        %v2186 = vunpack.c.l.b16 %v2174
        %v2187 = vpack.c.b16 %v2186, %v2185
        %v2196 = vunpack.c.l.b16 %v2175
        %v2197 = vunpack.c.l.b16 %v2176
        %v2198 = vunpack.c.l.b16 %v2177
        %v2199 = vunpack.c.l.b16 %v2178
        %v2200 = vunpack.c.l.b16 %v2179
        %v2201 = vunpack.c.l.b16 %v2180
        %v2202 = vunpack.c.l.b16 %v2181
        %v2203 = vunpack.c.l.b16 %v2182
        %v2204 = vpack.c.b16 %v2197, %v2196
        %v2205 = vpack.c.b16 %v2199, %v2198
        %v2206 = vpack.c.b16 %v2201, %v2200
        %v2207 = vpack.c.b16 %v2203, %v2202
        %vm2212 = vcmask 523264
        %v2214 = vsel %vm2212, %v2187, 0
        %2216 = vmatprep.subr.bf16.mxu0 0
        %2217 = vmatpush1.bf16.msra.mxu0 0
        %2218 = vmatprep.subr.bf16.mxu0 0
        %2219 = vmatpush1.bf16.msra.mxu0 0
        %2220 = vmatprep.subr.bf16.mxu0 0
        %2221 = vmatpush1.bf16.msra.mxu0 0
        %2222 = vmatprep.subr.bf16.mxu0 0
        %2223 = vmatpush1.bf16.msra.mxu0 0
        %2224 = vmatprep.subr.bf16.mxu0 0
        %2225 = vmatpush1.bf16.msra.mxu0 %v2207
        %2226 = vmatprep.subr.bf16.mxu0 0
        %2227 = vmatpush1.bf16.msra.mxu0 %v2206
        %2228 = vmatprep.subr.bf16.mxu0 0
        %2229 = vmatpush1.bf16.msra.mxu0 %v2205
        %2230 = vmatprep.subr.bf16.mxu0 0
        %2231 = vmatpush1.bf16.msra.mxu0 %v2204
        %2232 = vmatprep.subr.bf16.mxu0 0
        %2233 = vmatpush2.bf16.msra.mxu0 0
        %2234 = vmatprep.subr.bf16.mxu0 0
        %2235 = vmatpush2.bf16.msra.mxu0 0
        %2236 = vmatprep.subr.bf16.mxu0 0
        %2237 = vmatpush2.bf16.msra.mxu0 0
        %2238 = vmatprep.subr.bf16.mxu0 0
        %2239 = vmatpush2.bf16.msra.mxu0 0
        %2240 = vmatprep.subr.bf16.mxu0 0
        %2241 = vmatpush2.bf16.msra.mxu0 0
        %2242 = vmatprep.subr.bf16.mxu0 0
        %2243 = vmatpush2.bf16.msra.mxu0 0
        %2244 = vmatprep.subr.bf16.mxu0 0
        %2245 = vmatpush2.bf16.msra.mxu0 0
        %2246 = vmatprep.subr.bf16.mxu0 0
        %2247 = vmatpush2.bf16.msra.mxu0 0
        %2248 = vmatprep.mubr.bf16.mxu0 0
        %2249 = vmatmul.mubr.bf16.gmra.mxu0 %v2214
        %v2250 = vpop.f32.mrf.mxu0
        %v2251 = vadd.f32 0.0, %v2250
        %v2252 = vpop.f32.mrf.mxu0
        %v2253 = vpop.f32.mrf.mxu0
        %v2254 = vadd.f32 0.0, %v2253
        %v2255 = vpop.f32.mrf.mxu0
        %2256 = vdwg.mxu0
        %2257 = vst.msk [vmem:[%s264] sm:$0xff] %vm2212, %v2251
        %2258 = vst.msk [vmem:[%s264 + $0x8] sm:$0xff] %vm2212, %v2254
        %s2259 = sand.u32 %s116, 1
        %s2260 = scalar_lea.sflag [#allocation8], %s2259
        %s2261 = sand.u32 %s116, 1
        %s2262 = smul.addr %s2261, 16
        %s2263 = scalar_lea.vmem [#allocation12], %s2262
        %s2264 = sand.u32 %s144, 1
        %s2265 = scalar_lea.sflag [#allocation14], %s2264
        %s2266 = sand.u32 %s144, 1
        %s2267 = smul.addr %s2266, 64
        %s2268 = scalar_lea.vmem [#allocation13], %s2267
        // Predicated region
        $region49: #{tpu_custom_call.1} parent=31 // pred_check
          %p2269 = pneg %p126
        $region50: #{tpu_custom_call.1} parent=31 // pred_check_branch
          %2271 = sbr.rel (%p2269) target = $region52
        $region51: #{tpu_custom_call.1} parent=31 // pred_region
          %s2272 = smul.u32 2, %s31
          %s2274 = ssub.s32 256, 256
          %2275 = vsyncadd %s2260, %s2274
          %s2276 = smul.addr %s30, 4
          %s2277 = sadd.s32 %s2272, %s2276
          %s2278 = smul.addr %s2277, 128
          %s2279 = scalar_lea.hbm %s3, %s2278
          %s2280 = sshll.u32 %s2263, 4
          %s2281 = int_to_ptr.vmem [resolvable:$true] %s2280
          %2286 = dma.vmem_to_hbm [thread:$0]  %s2281, 256, %s2279, %s2260, 128, 128, 8
        $region52: #{tpu_custom_call.1} parent=31 // pred_fallthru
          _
        // Predicated region
        $region53: #{tpu_custom_call.1} parent=31 // pred_check
          %p2287 = pneg %p154
        $region54: #{tpu_custom_call.1} parent=31 // pred_check_branch
          %2289 = sbr.rel (%p2287) target = $region56
        $region55: #{tpu_custom_call.1} parent=31 // pred_region
          #allocation16 [shape = 'u32[6]{0}', space=smem, size = 0x18, scoped, tag = 'DMA stride descriptor']
          %s2290 = smul.u32 2, %s31
          %s2292 = ssub.s32 1024, 1024
          %2293 = vsyncadd %s2265, %s2292
          %s2294 = smul.addr %s30, 32
          %s2295 = sadd.s32 %s2290, %s2294
          %s2296 = smul.addr %s2295, 64
          %s2297 = scalar_lea.hbm %s4, %s2296
          %s2299 = sshll.u32 1, 14
          %s2300 = sxor.u32 4294967295, %s2299
          %s2303 = sshll.u32 7, 18
          %s2304 = sxor.u32 4294967295, %s2303
          %s2305 = sand.u32 0, %s2304
          %s2307 = sor.u32 %s2305, 0
          %s2308 = sshll.u32 %s2268, 4
          %s2309 = int_to_ptr.vmem [resolvable:$true] %s2308
          %2315 = sst [smem:[#allocation16]] 128
          %s2316 = scalar_lea.smem [#allocation16], 1
          %2317 = sst [smem:[%s2316]] 256
          %s2318 = scalar_lea.smem [#allocation16], 2
          %2319 = sst [smem:[%s2318]] 2
          %s2320 = scalar_lea.smem [#allocation16], 3
          %2321 = sst [smem:[%s2320]] 64
          %s2322 = scalar_lea.smem [#allocation16], 4
          %2323 = sst [smem:[%s2322]] 64
          %s2324 = scalar_lea.smem [#allocation16], 5
          %2325 = sst [smem:[%s2324]] 4
          %2327 = dma.general %s2309, 1024, %s2297, %s2265, 131072, [#allocation16], %s2307, 0
        $region56: #{tpu_custom_call.1} parent=31 // pred_fallthru
          _
      $region32: #{tpu_custom_call.1} parent=5 // pred_fallthru
        _
      %p2328 = scmp.le.s32.totalorder 2, %s21
      // Predicated region
      $region57: #{tpu_custom_call.1} parent=5 // pred_check
        %p2329 = pneg %p2328
      $region58: #{tpu_custom_call.1} parent=5 // pred_check_branch
        %2331 = sbr.rel (%p2329) target = $region60
      $region59: #{tpu_custom_call.1} parent=5 // pred_region
        %s2332 = ssub.s32 %s21, 2
        // Predicated region
        $region61: #{tpu_custom_call.1} parent=59 // pred_check
          %p2333 = pneg %p132
        $region62: #{tpu_custom_call.1} parent=59 // pred_check_branch
          %2335 = sbr.rel (%p2333) target = $region64
        $region63: #{tpu_custom_call.1} parent=59 // pred_region
          %s2336 = sand.u32 %s117, 1
          %s2337 = scalar_lea.sflag [#allocation8], %s2336
          %s2338 = sand.u32 %s117, 1
          %s2339 = smul.addr %s2338, 16
          %s2340 = scalar_lea.vmem [#allocation12], %s2339
          %2341 = dma.done %s2337, 256
        $region64: #{tpu_custom_call.1} parent=59 // pred_fallthru
          _
        // Predicated region
        $region65: #{tpu_custom_call.1} parent=59 // pred_check
          %p2342 = pneg %p160
        $region66: #{tpu_custom_call.1} parent=59 // pred_check_branch
          %2344 = sbr.rel (%p2342) target = $region68
        $region67: #{tpu_custom_call.1} parent=59 // pred_region
          %s2345 = sand.u32 %s145, 1
          %s2346 = scalar_lea.sflag [#allocation14], %s2345
          %s2347 = sand.u32 %s145, 1
          %s2348 = smul.addr %s2347, 64
          %s2349 = scalar_lea.vmem [#allocation13], %s2348
          %2350 = dma.done %s2346, 1024
        $region68: #{tpu_custom_call.1} parent=59 // pred_fallthru
          _
      $region60: #{tpu_custom_call.1} parent=5 // pred_fallthru
        _
    $region6: #{tpu_custom_call.1} parent=1 // loop_footer
      %s25 = sadd.s32 1, %s21
    $region7: #{tpu_custom_call.1} parent=1 // loop_footer_branch
      %20 = sbr.rel target = $region3
    $region8: #{tpu_custom_call.1} parent=1 // loop_exit
      _
    %2351 = vsyncpa [#allocation7], 1
    %s2352 = scalar_lea.sflag [#allocation7], 1
    %2353 = vsyncpa %s2352, 1
    %2354 = vsyncpa [#allocation10], 1
    %2355 = vsyncpa [#allocation8], 1
    %s2356 = scalar_lea.sflag [#allocation8], 1
    %2357 = vsyncpa %s2356, 1
    %2358 = vsyncpa [#allocation14], 1
    %s2359 = scalar_lea.sflag [#allocation14], 1
    %2360 = vsyncpa %s2359, 1

</llo_original>
